<compile_context>
chip_gen: v7x
topology: tpu7x:2x2x1
jax: 0.10.0
libtpu: 0.0.40
codegen_flags: <defaults>
</compile_context>

<pallas_src>
import jax
import jax.numpy as jnp
from jax.experimental import pallas as pl
from jax.experimental.pallas import tpu as pltpu


def _disc_kernel(x_ref, w1_ref, c1_ref, w2_ref, c2_ref, w3_ref, b3_ref, o_ref):
    """Fused 3-layer discriminator head on one (TB, emb_dim) batch tile.

    w1/w2 are bf16 (MXU native rate), biases / w3-row / accumulation are f32.
    """
    neg_slope = jnp.float32(0.01)

    x = x_ref[...].astype(jnp.bfloat16)

    # --- Layer 1: Linear(emb_dim, 512) [BN folded in] + LeakyReLU (+ Dropout=id) ---
    h1 = jnp.dot(x, w1_ref[...], preferred_element_type=jnp.float32) + c1_ref[...]
    h1 = jnp.where(h1 > 0, h1, neg_slope * h1)

    # --- Layer 2: Linear(512, 1024) [BN folded in] + LeakyReLU (+ Dropout=id) ---
    h2 = jnp.dot(h1.astype(jnp.bfloat16), w2_ref[...],
                 preferred_element_type=jnp.float32) + c2_ref[...]
    h2 = jnp.where(h2 > 0, h2, neg_slope * h2)

    # --- Layer 3: Linear(1024, 1) as VPU multiply + lane reduction (N=1 would waste MXU) ---
    out = jnp.sum(h2 * w3_ref[...], axis=-1, keepdims=True) + b3_ref[...]
    o_ref[...] = out.astype(o_ref.dtype)


def adda_discriminator(x, params, *, tb=256):
    """Run the fused discriminator head as a batch-tiled pallas_call.

    x: (B, emb_dim) float32
    params: folded parameters (see fold_params).
    Returns: (B, 1) float32 logits.
    """
    B, E = x.shape
    tb = min(tb, B)  # small-batch path: single full-extent block
    grid = (pl.cdiv(B, tb),)

    w1, c1 = params["w1"], params["c1"]
    w2, c2 = params["w2"], params["c2"]
    w3, b3 = params["w3"], params["b3"]

    def resident(a):
        nd = a.ndim
        return pl.BlockSpec(a.shape, lambda i, _nd=nd: (0,) * _nd)

    in_specs = [
        pl.BlockSpec((tb, E), lambda i: (i, 0)),   # x: batch-tiled
        resident(w1), resident(c1),                # weights stay VMEM-resident
        resident(w2), resident(c2),
        resident(w3), resident(b3),
    ]
    out_spec = pl.BlockSpec((tb, 1), lambda i: (i, 0))

    return pl.pallas_call(
        _disc_kernel,
        out_shape=jax.ShapeDtypeStruct((B, 1), jnp.float32),
        grid_spec=pl.GridSpec(grid=grid, in_specs=in_specs, out_specs=out_spec),
        compiler_params=pltpu.CompilerParams(
            dimension_semantics=("parallel",),   # lets v7x shard tiles across its 2 TCs
        ),
    )(x, w1, c1, w2, c2, w3, b3)


def fold_bn(gamma, beta, running_mean, running_var, eps=1e-3):
    """Eval-mode BatchNorm1d -> per-feature affine (scale, shift). eps=1e-3 per module."""
    scale = gamma / jnp.sqrt(running_var + eps)
    shift = beta - running_mean * scale
    return scale, shift


def init_raw_params(key, emb_dim):
    """Deterministic synthetic parameters matching the PyTorch module shapes.

    PyTorch nn.Linear stores weight as (out, in); we keep (in, out).
    """
    ks = jax.random.split(key, 14)

    def lin(kw, kb, fan_in, fan_out):
        bound = 1.0 / jnp.sqrt(jnp.float32(fan_in))
        w = jax.random.uniform(kw, (fan_in, fan_out), jnp.float32, -bound, bound)
        b = jax.random.uniform(kb, (1, fan_out), jnp.float32, -bound, bound)
        return w, b

    w1, b1 = lin(ks[0], ks[1], emb_dim, 512)
    w2, b2 = lin(ks[2], ks[3], 512, 1024)
    w3, b3 = lin(ks[4], ks[5], 1024, 1)

    # BatchNorm params with non-trivial, independently drawn running stats.
    g1 = 1.0 + 0.1 * jax.random.normal(ks[6], (1, 512), jnp.float32)
    be1 = 0.1 * jax.random.normal(ks[7], (1, 512), jnp.float32)
    m1 = 0.05 * jax.random.normal(ks[8], (1, 512), jnp.float32)
    v1 = 1.0 + 0.1 * jax.random.uniform(ks[9], (1, 512), jnp.float32)

    g2 = 1.0 + 0.1 * jax.random.normal(ks[10], (1, 1024), jnp.float32)
    be2 = 0.1 * jax.random.normal(ks[11], (1, 1024), jnp.float32)
    m2 = 0.05 * jax.random.normal(ks[12], (1, 1024), jnp.float32)
    v2 = 1.0 + 0.1 * jax.random.uniform(ks[13], (1, 1024), jnp.float32)

    return {
        "w1": w1, "b1": b1, "g1": g1, "be1": be1, "m1": m1, "v1": v1,
        "w2": w2, "b2": b2, "g2": g2, "be2": be2, "m2": m2, "v2": v2,
        "w3": w3, "b3": b3,
    }


def fold_params(raw):
    """One-time offline fold: BN affine into linear weights, bf16 MXU weights."""
    s1, t1 = fold_bn(raw["g1"], raw["be1"], raw["m1"], raw["v1"], eps=1e-3)
    s2, t2 = fold_bn(raw["g2"], raw["be2"], raw["m2"], raw["v2"], eps=1e-3)

    w1f = (raw["w1"] * s1).astype(jnp.bfloat16)          # column scale
    c1 = raw["b1"] * s1 + t1                              # f32
    w2f = (raw["w2"] * s2).astype(jnp.bfloat16)
    c2 = raw["b2"] * s2 + t2
    w3_row = raw["w3"].reshape(1, -1)                     # (1, 1024) f32 for VPU reduce
    b3 = raw["b3"]                                        # (1, 1) f32

    return {"w1": w1f, "c1": c1, "w2": w2f, "c2": c2, "w3": w3_row, "b3": b3}


def reference_forward(x, raw):
    """Plain-JAX f32 reference replicating the PyTorch module in eval mode."""
    s1, t1 = fold_bn(raw["g1"], raw["be1"], raw["m1"], raw["v1"], eps=1e-3)
    s2, t2 = fold_bn(raw["g2"], raw["be2"], raw["m2"], raw["v2"], eps=1e-3)
    h = x @ raw["w1"] + raw["b1"]
    h = h * s1 + t1
    h = jnp.where(h > 0, h, 0.01 * h)
    h = h @ raw["w2"] + raw["b2"]
    h = h * s2 + t2
    h = jnp.where(h > 0, h, 0.01 * h)
    return h @ raw["w3"] + raw["b3"]


if __name__ == "__main__":
    key = jax.random.PRNGKey(0)
    k_x, k_p = jax.random.split(key)

    B, EMB = 8, 32
    x = jax.random.normal(k_x, (B, EMB), jnp.float32)
    raw = init_raw_params(k_p, EMB)
    params = fold_params(raw)

    out = adda_discriminator(x, params)
    out = jax.block_until_ready(out)

    ref = reference_forward(x, raw)
    assert out.shape == (B, 1)
    # bf16 MXU operands (f32 accumulation) -> loosened tolerance vs. f32 reference.
    assert jnp.allclose(out, ref, atol=5e-2, rtol=5e-2), (out, ref)

    print("KERNEL_OK")
</pallas_src>

<mosaic_0001>
module attributes {stable_mosaic.version = 11 : i64} {
  func.func @_disc_kernel(%arg0: i32, %arg1: memref<8x32xf32, #tpu.memory_space<vmem>>, %arg2: memref<32x512xbf16, #tpu.memory_space<vmem>>, %arg3: memref<1x512xf32, #tpu.memory_space<vmem>>, %arg4: memref<512x1024xbf16, #tpu.memory_space<vmem>>, %arg5: memref<1x1024xf32, #tpu.memory_space<vmem>>, %arg6: memref<1x1024xf32, #tpu.memory_space<vmem>>, %arg7: memref<1x1xf32, #tpu.memory_space<vmem>>, %arg8: memref<8x1xf32, #tpu.memory_space<vmem>>) attributes {dimension_semantics = [#tpu.dimension_semantics<parallel>], iteration_bounds = array<i64: 1>, scalar_prefetch = 0 : i64, scratch_operands = 0 : i64, tpu.core_type = #tpu.core_type<tc>, window_params = [{transform_indices = @transform_0, window_bounds = array<i64: 8, 32>}, {pipeline_mode = #tpu.pipeline_mode<synchronous>, transform_indices = @transform_1, window_bounds = array<i64: 32, 512>}, {pipeline_mode = #tpu.pipeline_mode<synchronous>, transform_indices = @transform_2, window_bounds = array<i64: 1, 512>}, {pipeline_mode = #tpu.pipeline_mode<synchronous>, transform_indices = @transform_3, window_bounds = array<i64: 512, 1024>}, {pipeline_mode = #tpu.pipeline_mode<synchronous>, transform_indices = @transform_4, window_bounds = array<i64: 1, 1024>}, {pipeline_mode = #tpu.pipeline_mode<synchronous>, transform_indices = @transform_5, window_bounds = array<i64: 1, 1024>}, {pipeline_mode = #tpu.pipeline_mode<synchronous>, transform_indices = @transform_6, window_bounds = array<i64: 1, 1>}, {transform_indices = @transform_7, window_bounds = array<i64: 8, 1>}]} {
    %c0 = arith.constant 0 : index
    %c0_0 = arith.constant 0 : index
    %0 = vector.load %arg1[%c0, %c0_0] : memref<8x32xf32, #tpu.memory_space<vmem>>, vector<8x32xf32>
    %1 = arith.truncf %0 : vector<8x32xf32> to vector<8x32xbf16>
    %c0_1 = arith.constant 0 : index
    %c0_2 = arith.constant 0 : index
    %2 = vector.load %arg2[%c0_1, %c0_2] : memref<32x512xbf16, #tpu.memory_space<vmem>>, vector<32x512xbf16>
    %cst = arith.constant dense<0.000000e+00> : vector<8x512xf32>
    %3 = tpu.matmul %1, %2, %cst {dimension_numbers = #tpu.dot_dimension_numbers<[1], [0], [0], [1], [0, 0, 1, 1], [], []>} : vector<8x32xbf16>, vector<32x512xbf16>, vector<8x512xf32> -> vector<8x512xf32>
    %c0_3 = arith.constant 0 : index
    %c0_4 = arith.constant 0 : index
    %4 = vector.load %arg3[%c0_3, %c0_4] : memref<1x512xf32, #tpu.memory_space<vmem>>, vector<1x512xf32>
    %5 = vector.broadcast %4 : vector<1x512xf32> to vector<8x512xf32>
    %6 = arith.addf %3, %5 : vector<8x512xf32>
    %cst_5 = arith.constant 0.000000e+00 : f32
    %7 = vector.broadcast %cst_5 : f32 to vector<8x512xf32>
    %8 = arith.cmpf ogt, %6, %7 : vector<8x512xf32>
    %cst_6 = arith.constant 0.00999999977 : f32
    %9 = vector.broadcast %cst_6 : f32 to vector<8x512xf32>
    %10 = arith.mulf %9, %6 : vector<8x512xf32>
    %11 = arith.select %8, %6, %10 : vector<8x512xi1>, vector<8x512xf32>
    %12 = arith.truncf %11 : vector<8x512xf32> to vector<8x512xbf16>
    %c0_7 = arith.constant 0 : index
    %c0_8 = arith.constant 0 : index
    %13 = vector.load %arg4[%c0_7, %c0_8] : memref<512x1024xbf16, #tpu.memory_space<vmem>>, vector<512x1024xbf16>
    %cst_9 = arith.constant dense<0.000000e+00> : vector<8x1024xf32>
    %14 = tpu.matmul %12, %13, %cst_9 {dimension_numbers = #tpu.dot_dimension_numbers<[1], [0], [0], [1], [0, 0, 1, 1], [], []>} : vector<8x512xbf16>, vector<512x1024xbf16>, vector<8x1024xf32> -> vector<8x1024xf32>
    %c0_10 = arith.constant 0 : index
    %c0_11 = arith.constant 0 : index
    %15 = vector.load %arg5[%c0_10, %c0_11] : memref<1x1024xf32, #tpu.memory_space<vmem>>, vector<1x1024xf32>
    %16 = vector.broadcast %15 : vector<1x1024xf32> to vector<8x1024xf32>
    %17 = arith.addf %14, %16 : vector<8x1024xf32>
    %cst_12 = arith.constant 0.000000e+00 : f32
    %18 = vector.broadcast %cst_12 : f32 to vector<8x1024xf32>
    %19 = arith.cmpf ogt, %17, %18 : vector<8x1024xf32>
    %cst_13 = arith.constant 0.00999999977 : f32
    %20 = vector.broadcast %cst_13 : f32 to vector<8x1024xf32>
    %21 = arith.mulf %20, %17 : vector<8x1024xf32>
    %22 = arith.select %19, %17, %21 : vector<8x1024xi1>, vector<8x1024xf32>
    %c0_14 = arith.constant 0 : index
    %c0_15 = arith.constant 0 : index
    %23 = vector.load %arg6[%c0_14, %c0_15] : memref<1x1024xf32, #tpu.memory_space<vmem>>, vector<1x1024xf32>
    %24 = vector.broadcast %23 : vector<1x1024xf32> to vector<8x1024xf32>
    %25 = arith.mulf %22, %24 : vector<8x1024xf32>
    %cst_16 = arith.constant dense<0.000000e+00> : vector<8xf32>
    %26 = vector.multi_reduction <add>, %25, %cst_16 [1] : vector<8x1024xf32> to vector<8xf32>
    %27 = vector.shape_cast %26 : vector<8xf32> to vector<8x1xf32>
    %c0_17 = arith.constant 0 : index
    %c0_18 = arith.constant 0 : index
    %28 = vector.load %arg7[%c0_17, %c0_18] : memref<1x1xf32, #tpu.memory_space<vmem>>, vector<1x1xf32>
    %29 = vector.broadcast %28 : vector<1x1xf32> to vector<8x1xf32>
    %30 = arith.addf %27, %29 : vector<8x1xf32>
    %c0_19 = arith.constant 0 : index
    %c0_20 = arith.constant 0 : index
    %31 = vector.load %arg8[%c0_19, %c0_20] : memref<8x1xf32, #tpu.memory_space<vmem>>, vector<8x1xf32>
    tpu.vector_store %arg8[%c0_19, %c0_20], %30 {strides = array<i32>} : memref<8x1xf32, #tpu.memory_space<vmem>>, vector<8x1xf32>,
    return
  }
  func.func @transform_0(%arg0: i32) -> (i32, i32) {
    %c0_i32 = arith.constant 0 : i32
    %c0_i32_0 = arith.constant 0 : i32
    return %arg0, %c0_i32 : i32, i32
  }
  func.func @transform_1(%arg0: i32) -> (i32, i32) {
    %c0_i32 = arith.constant 0 : i32
    %c0_i32_0 = arith.constant 0 : i32
    %c0_i32_1 = arith.constant 0 : i32
    return %c0_i32, %c0_i32_0 : i32, i32
  }
  func.func @transform_2(%arg0: i32) -> (i32, i32) {
    %c0_i32 = arith.constant 0 : i32
    %c0_i32_0 = arith.constant 0 : i32
    %c0_i32_1 = arith.constant 0 : i32
    return %c0_i32, %c0_i32_0 : i32, i32
  }
  func.func @transform_3(%arg0: i32) -> (i32, i32) {
    %c0_i32 = arith.constant 0 : i32
    %c0_i32_0 = arith.constant 0 : i32
    %c0_i32_1 = arith.constant 0 : i32
    return %c0_i32, %c0_i32_0 : i32, i32
  }
  func.func @transform_4(%arg0: i32) -> (i32, i32) {
    %c0_i32 = arith.constant 0 : i32
    %c0_i32_0 = arith.constant 0 : i32
    %c0_i32_1 = arith.constant 0 : i32
    return %c0_i32, %c0_i32_0 : i32, i32
  }
  func.func @transform_5(%arg0: i32) -> (i32, i32) {
    %c0_i32 = arith.constant 0 : i32
    %c0_i32_0 = arith.constant 0 : i32
    %c0_i32_1 = arith.constant 0 : i32
    return %c0_i32, %c0_i32_0 : i32, i32
  }
  func.func @transform_6(%arg0: i32) -> (i32, i32) {
    %c0_i32 = arith.constant 0 : i32
    %c0_i32_0 = arith.constant 0 : i32
    %c0_i32_1 = arith.constant 0 : i32
    return %c0_i32, %c0_i32_0 : i32, i32
  }
  func.func @transform_7(%arg0: i32) -> (i32, i32) {
    %c0_i32 = arith.constant 0 : i32
    %c0_i32_0 = arith.constant 0 : i32
    return %arg0, %c0_i32 : i32, i32
  }
}

</mosaic_0001>

<llo_original>
// kernel: tpu_custom_call.1
$region0: #{tpu_custom_call.1}
  #allocation0 [shape = 'u32[]', space=smem, size = 0x4, offset = 0x4, fixed_abs, tag = 'smem constant byte address 0x4 - core index']
  #allocation1 [shape = 'u32[144,128]{1,0:T(1,128)}', space=vmem, size = 0x12000, scoped, tag = 'internal scratch']
  #allocation2 [shape = 'f32[1,1]{1,0:T(1,128)S(1)}', space=vmem, size = 0x200, scoped, tag = 'scoped memory for tpu_custom_call.1']
  %s0 = inlined_call_operand.hbm [shape: f32[8,32], index: 0, kind: input, shape index: {}]
  %s1 = inlined_call_operand.hbm [shape: bf16[32,512], index: 1, kind: input, shape index: {}]
  %s2 = inlined_call_operand.hbm [shape: f32[1,512], index: 2, kind: input, shape index: {}]
  %s3 = inlined_call_operand.hbm [shape: bf16[512,1024], index: 3, kind: input, shape index: {}]
  %s4 = inlined_call_operand.vmem [shape: f32[1,1024], index: 4, kind: input, shape index: {}]
  %s5 = inlined_call_operand.vmem [shape: f32[1,1024], index: 5, kind: input, shape index: {}]
  %s6 = inlined_call_operand.<no memory space> [shape: f32[1,1], index: 6, kind: input, shape index: {}]
  %s7 = inlined_call_operand.vmem [shape: f32[8,1], index: 7, kind: output, shape index: {}]
  %s8 = sld [smem:[#allocation0]]
  $region54: #{tpu_custom_call.1} parent=0
    _
  %s10 = ssub.s32 1, %s8
  %s11 = scalar_select 0, %s10, %s8
  %v12 = vstv %s6
  %13 = vst [vmem:[#allocation2] sm:$0x1] %v12
  $region1: #{tpu_custom_call.1} parent=0
    #allocation3 [shape = 'u8[4096]{0}', space=vmem, size = 0x1000, scoped, tag = 'input window, operand 0, single buffered']
    #allocation4 [shape = 's32[1]{0}', space=sflag, size = 0x4, scoped, tag = 'scoped memory for tpu_custom_call.1']
    #allocation5 [shape = 'u8[32768]{0}', space=vmem, size = 0x8000, scoped, tag = 'input window, operand 1, single buffered']
    #allocation6 [shape = 's32[1]{0}', space=sflag, size = 0x4, scoped, tag = 'scoped memory for tpu_custom_call.1']
    #allocation7 [shape = 'u8[2048]{0}', space=vmem, size = 0x800, scoped, tag = 'input window, operand 2, single buffered']
    #allocation8 [shape = 'u8[1048576]{0}', space=vmem, size = 0x100000, scoped, tag = 'input window, operand 3, single buffered']
    #allocation9 [shape = 's32[1]{0}', space=sflag, size = 0x4, scoped, tag = 'scoped memory for tpu_custom_call.1']
    %14 = vsyncpa [#allocation4], 0
    %15 = vsyncpa [#allocation6], 0
    %16 = vsyncpa [#allocation9], 0
    // Predicated region
    $region2: #{tpu_custom_call.1} parent=1 // pred_check
      _
    $region3: #{tpu_custom_call.1} parent=1 // pred_check_branch
      %18 = sbr.rel (0) target = $region5
    $region4: #{tpu_custom_call.1} parent=1 // pred_region
      %s20 = ssub.s32 128, 128
      %21 = vsyncadd [#allocation4], %s20
      %s23 = sshll.u32 [#allocation3], 4
      %s24 = int_to_ptr.vmem [resolvable:$true] %s23
      %26 = dma.hbm_to_vmem [thread:$0]  %s0, 128, %s24, [#allocation4]
    $region5: #{tpu_custom_call.1} parent=1 // pred_fallthru
      _
    // Predicated region
    $region6: #{tpu_custom_call.1} parent=1 // pred_check
      _
    $region7: #{tpu_custom_call.1} parent=1 // pred_check_branch
      %28 = sbr.rel (0) target = $region9
    $region8: #{tpu_custom_call.1} parent=1 // pred_region
      %s30 = ssub.s32 1024, 1024
      %31 = vsyncadd [#allocation6], %s30
      %s32 = sshll.u32 [#allocation5], 4
      %s33 = int_to_ptr.vmem [resolvable:$true] %s32
      %38 = dma.hbm_to_vmem [thread:$0]  %s1, 1024, %s33, [#allocation6], 256, 256, 16
    $region9: #{tpu_custom_call.1} parent=1 // pred_fallthru
      _
    // Predicated region
    $region10: #{tpu_custom_call.1} parent=1 // pred_check
      _
    $region11: #{tpu_custom_call.1} parent=1 // pred_check_branch
      %40 = sbr.rel (0) target = $region13
    $region12: #{tpu_custom_call.1} parent=1 // pred_region
      %s42 = ssub.s32 64, 64
      %43 = vsyncadd [#allocation6], %s42
      %s45 = sshll.u32 [#allocation7], 4
      %s46 = int_to_ptr.vmem [resolvable:$true] %s45
      %48 = dma.hbm_to_vmem [thread:$0]  %s2, 64, %s46, [#allocation6]
    $region13: #{tpu_custom_call.1} parent=1 // pred_fallthru
      _
    // Predicated region
    $region14: #{tpu_custom_call.1} parent=1 // pred_check
      _
    $region15: #{tpu_custom_call.1} parent=1 // pred_check_branch
      %50 = sbr.rel (0) target = $region17
    $region16: #{tpu_custom_call.1} parent=1 // pred_region
      %s52 = ssub.s32 32768, 32768
      %53 = vsyncadd [#allocation9], %s52
      %s54 = sshll.u32 [#allocation8], 4
      %s55 = int_to_ptr.vmem [resolvable:$true] %s54
      %60 = dma.hbm_to_vmem [thread:$0]  %s3, 32768, %s55, [#allocation9], 512, 512, 32
    $region17: #{tpu_custom_call.1} parent=1 // pred_fallthru
      _
    // Predicated region
    $region18: #{tpu_custom_call.1} parent=1 // pred_check
      _
    $region19: #{tpu_custom_call.1} parent=1 // pred_check_branch
      %62 = sbr.rel (0) target = $region21
    $region20: #{tpu_custom_call.1} parent=1 // pred_region
      _
    $region21: #{tpu_custom_call.1} parent=1 // pred_fallthru
      _
    // Predicated region
    $region22: #{tpu_custom_call.1} parent=1 // pred_check
      _
    $region23: #{tpu_custom_call.1} parent=1 // pred_check_branch
      %64 = sbr.rel (0) target = $region25
    $region24: #{tpu_custom_call.1} parent=1 // pred_region
      _
    $region25: #{tpu_custom_call.1} parent=1 // pred_fallthru
      _
    // Predicated region
    $region26: #{tpu_custom_call.1} parent=1 // pred_check
      _
    $region27: #{tpu_custom_call.1} parent=1 // pred_check_branch
      %66 = sbr.rel (0) target = $region29
    $region28: #{tpu_custom_call.1} parent=1 // pred_region
      _
    $region29: #{tpu_custom_call.1} parent=1 // pred_fallthru
      _
    // Predicated region
    $region30: #{tpu_custom_call.1} parent=1 // pred_check
      _
    $region31: #{tpu_custom_call.1} parent=1 // pred_check_branch
      %68 = sbr.rel (0) target = $region33
    $region32: #{tpu_custom_call.1} parent=1 // pred_region
      %69 = dma.done [#allocation4], 128
    $region33: #{tpu_custom_call.1} parent=1 // pred_fallthru
      _
    // Predicated region
    $region34: #{tpu_custom_call.1} parent=1 // pred_check
      _
    $region35: #{tpu_custom_call.1} parent=1 // pred_check_branch
      %71 = sbr.rel (0) target = $region37
    $region36: #{tpu_custom_call.1} parent=1 // pred_region
      %72 = dma.done [#allocation6], 1024
    $region37: #{tpu_custom_call.1} parent=1 // pred_fallthru
      _
    // Predicated region
    $region38: #{tpu_custom_call.1} parent=1 // pred_check
      _
    $region39: #{tpu_custom_call.1} parent=1 // pred_check_branch
      %74 = sbr.rel (0) target = $region41
    $region40: #{tpu_custom_call.1} parent=1 // pred_region
      %75 = dma.done [#allocation6], 64
    $region41: #{tpu_custom_call.1} parent=1 // pred_fallthru
      _
    // Predicated region
    $region42: #{tpu_custom_call.1} parent=1 // pred_check
      _
    $region43: #{tpu_custom_call.1} parent=1 // pred_check_branch
      %77 = sbr.rel (0) target = $region45
    $region44: #{tpu_custom_call.1} parent=1 // pred_region
      %78 = dma.done [#allocation9], 32768
    $region45: #{tpu_custom_call.1} parent=1 // pred_fallthru
      _
    %v80 = vld [vmem:[#allocation3] sm:$0xff]
    %v81 = vpack.c.bf16 %v80, %v80
    %v82 = vld [vmem:[#allocation5] sm:$0xff]
    %v83 = vld [vmem:[#allocation5 + $0x8] sm:$0xff]
    %v84 = vld [vmem:[#allocation5 + $0x10] sm:$0xff]
    %v85 = vld [vmem:[#allocation5 + $0x18] sm:$0xff]
    %v86 = vld [vmem:[#allocation5 + $0x20] sm:$0xff]
    %v87 = vld [vmem:[#allocation5 + $0x28] sm:$0xff]
    %v88 = vld [vmem:[#allocation5 + $0x30] sm:$0xff]
    %v89 = vld [vmem:[#allocation5 + $0x38] sm:$0xff]
    %v90 = vld [vmem:[#allocation7] sm:$0xf]
    %v92 = vlaneseq
    %v93 = vshrl.u32 %v92, 7
    %v94 = vsub.s32 0, %v93
    %v95 = vrot.slane %v90, %v94
    %v96 = vlaneseq
    %v97 = vshrl.u32 %v96, 7
    %v98 = vsub.s32 1, %v97
    %v99 = vrot.slane %v90, %v98
    %v100 = vlaneseq
    %v101 = vshrl.u32 %v100, 7
    %v102 = vsub.s32 2, %v101
    %v103 = vrot.slane %v90, %v102
    %v104 = vlaneseq
    %v105 = vshrl.u32 %v104, 7
    %v106 = vsub.s32 3, %v105
    %v107 = vrot.slane %v90, %v106
    %v120 = vunpack.c.l.b16 %v82
    %v121 = vunpack.c.h.b16 %v82
    %v122 = vunpack.c.l.b16 %v83
    %v123 = vunpack.c.h.b16 %v83
    %v124 = vunpack.c.l.b16 %v84
    %v125 = vunpack.c.h.b16 %v84
    %v126 = vunpack.c.l.b16 %v85
    %v127 = vunpack.c.h.b16 %v85
    %v128 = vunpack.c.l.b16 %v86
    %v129 = vunpack.c.h.b16 %v86
    %v130 = vunpack.c.l.b16 %v87
    %v131 = vunpack.c.h.b16 %v87
    %v132 = vunpack.c.l.b16 %v88
    %v133 = vunpack.c.h.b16 %v88
    %v134 = vunpack.c.l.b16 %v89
    %v135 = vunpack.c.h.b16 %v89
    %v136 = vpack.c.b16 %v124, %v120
    %v137 = vpack.c.b16 %v125, %v121
    %v138 = vpack.c.b16 %v126, %v122
    %v139 = vpack.c.b16 %v127, %v123
    %v140 = vpack.c.b16 %v132, %v128
    %v141 = vpack.c.b16 %v133, %v129
    %v142 = vpack.c.b16 %v134, %v130
    %v143 = vpack.c.b16 %v135, %v131
    %vm152 = vcmask 261120
    %v154 = vsel %vm152, %v81, 0
    %156 = vmatprep.subr.bf16.mxu0 %v137
    %157 = vmatpush1.bf16.msra.mxu0 %v136
    %158 = vmatprep.subr.bf16.mxu0 %v141
    %159 = vmatpush1.bf16.msra.mxu0 %v140
    %160 = vmatprep.subr.bf16.mxu0 0
    %161 = vmatpush1.bf16.msra.mxu0 0
    %162 = vmatprep.subr.bf16.mxu0 0
    %163 = vmatpush1.bf16.msra.mxu0 0
    %164 = vmatprep.subr.bf16.mxu0 0
    %165 = vmatpush1.bf16.msra.mxu0 0
    %166 = vmatprep.subr.bf16.mxu0 0
    %167 = vmatpush1.bf16.msra.mxu0 0
    %168 = vmatprep.subr.bf16.mxu0 0
    %169 = vmatpush1.bf16.msra.mxu0 0
    %170 = vmatprep.subr.bf16.mxu0 0
    %171 = vmatpush1.bf16.msra.mxu0 0
    %172 = vmatprep.subr.bf16.mxu0 0
    %173 = vmatpush1.bf16.msra.mxu0 0
    %174 = vmatprep.subr.bf16.mxu0 0
    %175 = vmatpush1.bf16.msra.mxu0 0
    %176 = vmatprep.subr.bf16.mxu0 0
    %177 = vmatpush1.bf16.msra.mxu0 0
    %178 = vmatprep.subr.bf16.mxu0 0
    %179 = vmatpush1.bf16.msra.mxu0 0
    %180 = vmatprep.subr.bf16.mxu0 0
    %181 = vmatpush1.bf16.msra.mxu0 0
    %182 = vmatprep.subr.bf16.mxu0 0
    %183 = vmatpush1.bf16.msra.mxu0 0
    %184 = vmatprep.subr.bf16.mxu0 0
    %185 = vmatpush1.bf16.msra.mxu0 0
    %186 = vmatprep.subr.bf16.mxu0 0
    %187 = vmatpush1.bf16.msra.mxu0 0
    %188 = vmatprep.mubr.bf16.mxu0 0
    %189 = vmatmul.mubr.bf16.gmra.mrb[0].mxu0 %v154
    %v190 = vpop.f32.mrb[0].mxu0
    %v191 = vadd.f32 %v95, %v190
    %v192 = vpop.f32.mrb[0].mxu0
    %v193 = vadd.f32 %v99, %v192
    %v194 = vpop.f32.mrb[0].mxu0
    %v195 = vpop.f32.mrb[0].mxu0
    %196 = vdwg.mxu0
    %197 = vmatprep.subr.bf16.mxu0 %v139
    %198 = vmatpush1.bf16.msra.mxu0 %v138
    %199 = vmatprep.subr.bf16.mxu0 %v143
    %200 = vmatpush1.bf16.msra.mxu0 %v142
    %201 = vmatprep.subr.bf16.mxu0 0
    %202 = vmatpush1.bf16.msra.mxu0 0
    %203 = vmatprep.subr.bf16.mxu0 0
    %204 = vmatpush1.bf16.msra.mxu0 0
    %205 = vmatprep.subr.bf16.mxu0 0
    %206 = vmatpush1.bf16.msra.mxu0 0
    %207 = vmatprep.subr.bf16.mxu0 0
    %208 = vmatpush1.bf16.msra.mxu0 0
    %209 = vmatprep.subr.bf16.mxu0 0
    %210 = vmatpush1.bf16.msra.mxu0 0
    %211 = vmatprep.subr.bf16.mxu0 0
    %212 = vmatpush1.bf16.msra.mxu0 0
    %213 = vmatprep.subr.bf16.mxu0 0
    %214 = vmatpush1.bf16.msra.mxu0 0
    %215 = vmatprep.subr.bf16.mxu0 0
    %216 = vmatpush1.bf16.msra.mxu0 0
    %217 = vmatprep.subr.bf16.mxu0 0
    %218 = vmatpush1.bf16.msra.mxu0 0
    %219 = vmatprep.subr.bf16.mxu0 0
    %220 = vmatpush1.bf16.msra.mxu0 0
    %221 = vmatprep.subr.bf16.mxu0 0
    %222 = vmatpush1.bf16.msra.mxu0 0
    %223 = vmatprep.subr.bf16.mxu0 0
    %224 = vmatpush1.bf16.msra.mxu0 0
    %225 = vmatprep.subr.bf16.mxu0 0
    %226 = vmatpush1.bf16.msra.mxu0 0
    %227 = vmatprep.subr.bf16.mxu0 0
    %228 = vmatpush1.bf16.msra.mxu0 0
    %229 = vmatprep.mubr.bf16.mxu0 0
    %230 = vmatmul.mubr.bf16.gmra.mrb[0].mxu0 %v154
    %v231 = vpop.f32.mrb[0].mxu0
    %v232 = vadd.f32 %v103, %v231
    %v233 = vpop.f32.mrb[0].mxu0
    %v234 = vadd.f32 %v107, %v233
    %v235 = vpop.f32.mrb[0].mxu0
    %v236 = vpop.f32.mrb[0].mxu0
    %237 = vdwg.mxu0
    %vm238 = vcmp.gt.f32.partialorder %v191, 0.0
    %vm239 = vcmp.gt.f32.partialorder %v193, 0.0
    %vm240 = vcmp.gt.f32.partialorder %v232, 0.0
    %vm241 = vcmp.gt.f32.partialorder %v234, 0.0
    %v242 = vmul.f32 %v191, 0.01
    %v243 = vmul.f32 %v193, 0.01
    %v244 = vmul.f32 %v232, 0.01
    %v245 = vmul.f32 %v234, 0.01
    %v246 = vsel %vm238, %v191, %v242
    %v247 = vsel %vm239, %v193, %v243
    %v248 = vsel %vm240, %v232, %v244
    %v249 = vsel %vm241, %v234, %v245
    %v250 = vpack.c.bf16 %v246, %v246
    %v251 = vpack.c.bf16 %v247, %v247
    %v252 = vpack.c.bf16 %v248, %v248
    %v253 = vpack.c.bf16 %v249, %v249
    %v254 = vld [vmem:[#allocation8] sm:$0xff]
    %v255 = vld [vmem:[#allocation8 + $0x8] sm:$0xff]
    %v256 = vld [vmem:[#allocation8 + $0x10] sm:$0xff]
    %v257 = vld [vmem:[#allocation8 + $0x18] sm:$0xff]
    %v258 = vld [vmem:[#allocation8 + $0x20] sm:$0xff]
    %v259 = vld [vmem:[#allocation8 + $0x28] sm:$0xff]
    %v260 = vld [vmem:[#allocation8 + $0x30] sm:$0xff]
    %v261 = vld [vmem:[#allocation8 + $0x38] sm:$0xff]
    %v262 = vld [vmem:[#allocation8 + $0x40] sm:$0xff]
    %v263 = vld [vmem:[#allocation8 + $0x48] sm:$0xff]
    %v264 = vld [vmem:[#allocation8 + $0x50] sm:$0xff]
    %v265 = vld [vmem:[#allocation8 + $0x58] sm:$0xff]
    %v266 = vld [vmem:[#allocation8 + $0x60] sm:$0xff]
    %v267 = vld [vmem:[#allocation8 + $0x68] sm:$0xff]
    %v268 = vld [vmem:[#allocation8 + $0x70] sm:$0xff]
    %v269 = vld [vmem:[#allocation8 + $0x78] sm:$0xff]
    %v270 = vld [vmem:[#allocation8 + $0x80] sm:$0xff]
    %v271 = vld [vmem:[#allocation8 + $0x88] sm:$0xff]
    %v272 = vld [vmem:[#allocation8 + $0x90] sm:$0xff]
    %v273 = vld [vmem:[#allocation8 + $0x98] sm:$0xff]
    %v274 = vld [vmem:[#allocation8 + $0xa0] sm:$0xff]
    %v275 = vld [vmem:[#allocation8 + $0xa8] sm:$0xff]
    %v276 = vld [vmem:[#allocation8 + $0xb0] sm:$0xff]
    %v277 = vld [vmem:[#allocation8 + $0xb8] sm:$0xff]
    %v278 = vld [vmem:[#allocation8 + $0xc0] sm:$0xff]
    %v279 = vld [vmem:[#allocation8 + $0xc8] sm:$0xff]
    %v280 = vld [vmem:[#allocation8 + $0xd0] sm:$0xff]
    %v281 = vld [vmem:[#allocation8 + $0xd8] sm:$0xff]
    %v282 = vld [vmem:[#allocation8 + $0xe0] sm:$0xff]
    %v283 = vld [vmem:[#allocation8 + $0xe8] sm:$0xff]
    %v284 = vld [vmem:[#allocation8 + $0xf0] sm:$0xff]
    %v285 = vld [vmem:[#allocation8 + $0xf8] sm:$0xff]
    %v286 = vld [vmem:[#allocation8 + $0x100] sm:$0xff]
    %v287 = vld [vmem:[#allocation8 + $0x108] sm:$0xff]
    %v288 = vld [vmem:[#allocation8 + $0x110] sm:$0xff]
    %v289 = vld [vmem:[#allocation8 + $0x118] sm:$0xff]
    %v290 = vld [vmem:[#allocation8 + $0x120] sm:$0xff]
    %v291 = vld [vmem:[#allocation8 + $0x128] sm:$0xff]
    %v292 = vld [vmem:[#allocation8 + $0x130] sm:$0xff]
    %v293 = vld [vmem:[#allocation8 + $0x138] sm:$0xff]
    %v294 = vld [vmem:[#allocation8 + $0x140] sm:$0xff]
    %v295 = vld [vmem:[#allocation8 + $0x148] sm:$0xff]
    %v296 = vld [vmem:[#allocation8 + $0x150] sm:$0xff]
    %v297 = vld [vmem:[#allocation8 + $0x158] sm:$0xff]
    %v298 = vld [vmem:[#allocation8 + $0x160] sm:$0xff]
    %v299 = vld [vmem:[#allocation8 + $0x168] sm:$0xff]
    %v300 = vld [vmem:[#allocation8 + $0x170] sm:$0xff]
    %v301 = vld [vmem:[#allocation8 + $0x178] sm:$0xff]
    %v302 = vld [vmem:[#allocation8 + $0x180] sm:$0xff]
    %v303 = vld [vmem:[#allocation8 + $0x188] sm:$0xff]
    %v304 = vld [vmem:[#allocation8 + $0x190] sm:$0xff]
    %v305 = vld [vmem:[#allocation8 + $0x198] sm:$0xff]
    %v306 = vld [vmem:[#allocation8 + $0x1a0] sm:$0xff]
    %v307 = vld [vmem:[#allocation8 + $0x1a8] sm:$0xff]
    %v308 = vld [vmem:[#allocation8 + $0x1b0] sm:$0xff]
    %v309 = vld [vmem:[#allocation8 + $0x1b8] sm:$0xff]
    %v310 = vld [vmem:[#allocation8 + $0x1c0] sm:$0xff]
    %v311 = vld [vmem:[#allocation8 + $0x1c8] sm:$0xff]
    %v312 = vld [vmem:[#allocation8 + $0x1d0] sm:$0xff]
    %v313 = vld [vmem:[#allocation8 + $0x1d8] sm:$0xff]
    %v314 = vld [vmem:[#allocation8 + $0x1e0] sm:$0xff]
    %v315 = vld [vmem:[#allocation8 + $0x1e8] sm:$0xff]
    %v316 = vld [vmem:[#allocation8 + $0x1f0] sm:$0xff]
    %v317 = vld [vmem:[#allocation8 + $0x1f8] sm:$0xff]
    %v318 = vld [vmem:[#allocation8 + $0x200] sm:$0xff]
    %v319 = vld [vmem:[#allocation8 + $0x208] sm:$0xff]
    %v320 = vld [vmem:[#allocation8 + $0x210] sm:$0xff]
    %v321 = vld [vmem:[#allocation8 + $0x218] sm:$0xff]
    %v322 = vld [vmem:[#allocation8 + $0x220] sm:$0xff]
    %v323 = vld [vmem:[#allocation8 + $0x228] sm:$0xff]
    %v324 = vld [vmem:[#allocation8 + $0x230] sm:$0xff]
    %v325 = vld [vmem:[#allocation8 + $0x238] sm:$0xff]
    %v326 = vld [vmem:[#allocation8 + $0x240] sm:$0xff]
    %v327 = vld [vmem:[#allocation8 + $0x248] sm:$0xff]
    %v328 = vld [vmem:[#allocation8 + $0x250] sm:$0xff]
    %v329 = vld [vmem:[#allocation8 + $0x258] sm:$0xff]
    %v330 = vld [vmem:[#allocation8 + $0x260] sm:$0xff]
    %v331 = vld [vmem:[#allocation8 + $0x268] sm:$0xff]
    %v332 = vld [vmem:[#allocation8 + $0x270] sm:$0xff]
    %v333 = vld [vmem:[#allocation8 + $0x278] sm:$0xff]
    %v334 = vld [vmem:[#allocation8 + $0x280] sm:$0xff]
    %v335 = vld [vmem:[#allocation8 + $0x288] sm:$0xff]
    %v336 = vld [vmem:[#allocation8 + $0x290] sm:$0xff]
    %v337 = vld [vmem:[#allocation8 + $0x298] sm:$0xff]
    %v338 = vld [vmem:[#allocation8 + $0x2a0] sm:$0xff]
    %v339 = vld [vmem:[#allocation8 + $0x2a8] sm:$0xff]
    %v340 = vld [vmem:[#allocation8 + $0x2b0] sm:$0xff]
    %v341 = vld [vmem:[#allocation8 + $0x2b8] sm:$0xff]
    %v342 = vld [vmem:[#allocation8 + $0x2c0] sm:$0xff]
    %v343 = vld [vmem:[#allocation8 + $0x2c8] sm:$0xff]
    %v344 = vld [vmem:[#allocation8 + $0x2d0] sm:$0xff]
    %v345 = vld [vmem:[#allocation8 + $0x2d8] sm:$0xff]
    %v346 = vld [vmem:[#allocation8 + $0x2e0] sm:$0xff]
    %v347 = vld [vmem:[#allocation8 + $0x2e8] sm:$0xff]
    %v348 = vld [vmem:[#allocation8 + $0x2f0] sm:$0xff]
    %v349 = vld [vmem:[#allocation8 + $0x2f8] sm:$0xff]
    %v350 = vld [vmem:[#allocation8 + $0x300] sm:$0xff]
    %v351 = vld [vmem:[#allocation8 + $0x308] sm:$0xff]
    %v352 = vld [vmem:[#allocation8 + $0x310] sm:$0xff]
    %v353 = vld [vmem:[#allocation8 + $0x318] sm:$0xff]
    %v354 = vld [vmem:[#allocation8 + $0x320] sm:$0xff]
    %v355 = vld [vmem:[#allocation8 + $0x328] sm:$0xff]
    %v356 = vld [vmem:[#allocation8 + $0x330] sm:$0xff]
    %v357 = vld [vmem:[#allocation8 + $0x338] sm:$0xff]
    %v358 = vld [vmem:[#allocation8 + $0x340] sm:$0xff]
    %v359 = vld [vmem:[#allocation8 + $0x348] sm:$0xff]
    %v360 = vld [vmem:[#allocation8 + $0x350] sm:$0xff]
    %v361 = vld [vmem:[#allocation8 + $0x358] sm:$0xff]
    %v362 = vld [vmem:[#allocation8 + $0x360] sm:$0xff]
    %v363 = vld [vmem:[#allocation8 + $0x368] sm:$0xff]
    %v364 = vld [vmem:[#allocation8 + $0x370] sm:$0xff]
    %v365 = vld [vmem:[#allocation8 + $0x378] sm:$0xff]
    %v366 = vld [vmem:[#allocation8 + $0x380] sm:$0xff]
    %v367 = vld [vmem:[#allocation8 + $0x388] sm:$0xff]
    %v368 = vld [vmem:[#allocation8 + $0x390] sm:$0xff]
    %v369 = vld [vmem:[#allocation8 + $0x398] sm:$0xff]
    %v370 = vld [vmem:[#allocation8 + $0x3a0] sm:$0xff]
    %v371 = vld [vmem:[#allocation8 + $0x3a8] sm:$0xff]
    %v372 = vld [vmem:[#allocation8 + $0x3b0] sm:$0xff]
    %v373 = vld [vmem:[#allocation8 + $0x3b8] sm:$0xff]
    %v374 = vld [vmem:[#allocation8 + $0x3c0] sm:$0xff]
    %v375 = vld [vmem:[#allocation8 + $0x3c8] sm:$0xff]
    %v376 = vld [vmem:[#allocation8 + $0x3d0] sm:$0xff]
    %v377 = vld [vmem:[#allocation8 + $0x3d8] sm:$0xff]
    %v378 = vld [vmem:[#allocation8 + $0x3e0] sm:$0xff]
    %v379 = vld [vmem:[#allocation8 + $0x3e8] sm:$0xff]
    %v380 = vld [vmem:[#allocation8 + $0x3f0] sm:$0xff]
    %v381 = vld [vmem:[#allocation8 + $0x3f8] sm:$0xff]
    %v382 = vld [vmem:[#allocation8 + $0x400] sm:$0xff]
    %v383 = vld [vmem:[#allocation8 + $0x408] sm:$0xff]
    %v384 = vld [vmem:[#allocation8 + $0x410] sm:$0xff]
    %v385 = vld [vmem:[#allocation8 + $0x418] sm:$0xff]
    %v386 = vld [vmem:[#allocation8 + $0x420] sm:$0xff]
    %v387 = vld [vmem:[#allocation8 + $0x428] sm:$0xff]
    %v388 = vld [vmem:[#allocation8 + $0x430] sm:$0xff]
    %v389 = vld [vmem:[#allocation8 + $0x438] sm:$0xff]
    %v390 = vld [vmem:[#allocation8 + $0x440] sm:$0xff]
    %v391 = vld [vmem:[#allocation8 + $0x448] sm:$0xff]
    %v392 = vld [vmem:[#allocation8 + $0x450] sm:$0xff]
    %v393 = vld [vmem:[#allocation8 + $0x458] sm:$0xff]
    %v394 = vld [vmem:[#allocation8 + $0x460] sm:$0xff]
    %v395 = vld [vmem:[#allocation8 + $0x468] sm:$0xff]
    %v396 = vld [vmem:[#allocation8 + $0x470] sm:$0xff]
    %v397 = vld [vmem:[#allocation8 + $0x478] sm:$0xff]
    %v398 = vld [vmem:[#allocation8 + $0x480] sm:$0xff]
    %v399 = vld [vmem:[#allocation8 + $0x488] sm:$0xff]
    %v400 = vld [vmem:[#allocation8 + $0x490] sm:$0xff]
    %v401 = vld [vmem:[#allocation8 + $0x498] sm:$0xff]
    %v402 = vld [vmem:[#allocation8 + $0x4a0] sm:$0xff]
    %v403 = vld [vmem:[#allocation8 + $0x4a8] sm:$0xff]
    %v404 = vld [vmem:[#allocation8 + $0x4b0] sm:$0xff]
    %v405 = vld [vmem:[#allocation8 + $0x4b8] sm:$0xff]
    %v406 = vld [vmem:[#allocation8 + $0x4c0] sm:$0xff]
    %v407 = vld [vmem:[#allocation8 + $0x4c8] sm:$0xff]
    %v408 = vld [vmem:[#allocation8 + $0x4d0] sm:$0xff]
    %v409 = vld [vmem:[#allocation8 + $0x4d8] sm:$0xff]
    %v410 = vld [vmem:[#allocation8 + $0x4e0] sm:$0xff]
    %v411 = vld [vmem:[#allocation8 + $0x4e8] sm:$0xff]
    %v412 = vld [vmem:[#allocation8 + $0x4f0] sm:$0xff]
    %v413 = vld [vmem:[#allocation8 + $0x4f8] sm:$0xff]
    %v414 = vld [vmem:[#allocation8 + $0x500] sm:$0xff]
    %v415 = vld [vmem:[#allocation8 + $0x508] sm:$0xff]
    %v416 = vld [vmem:[#allocation8 + $0x510] sm:$0xff]
    %v417 = vld [vmem:[#allocation8 + $0x518] sm:$0xff]
    %v418 = vld [vmem:[#allocation8 + $0x520] sm:$0xff]
    %v419 = vld [vmem:[#allocation8 + $0x528] sm:$0xff]
    %v420 = vld [vmem:[#allocation8 + $0x530] sm:$0xff]
    %v421 = vld [vmem:[#allocation8 + $0x538] sm:$0xff]
    %v422 = vld [vmem:[#allocation8 + $0x540] sm:$0xff]
    %v423 = vld [vmem:[#allocation8 + $0x548] sm:$0xff]
    %v424 = vld [vmem:[#allocation8 + $0x550] sm:$0xff]
    %v425 = vld [vmem:[#allocation8 + $0x558] sm:$0xff]
    %v426 = vld [vmem:[#allocation8 + $0x560] sm:$0xff]
    %v427 = vld [vmem:[#allocation8 + $0x568] sm:$0xff]
    %v428 = vld [vmem:[#allocation8 + $0x570] sm:$0xff]
    %v429 = vld [vmem:[#allocation8 + $0x578] sm:$0xff]
    %v430 = vld [vmem:[#allocation8 + $0x580] sm:$0xff]
    %v431 = vld [vmem:[#allocation8 + $0x588] sm:$0xff]
    %v432 = vld [vmem:[#allocation8 + $0x590] sm:$0xff]
    %v433 = vld [vmem:[#allocation8 + $0x598] sm:$0xff]
    %v434 = vld [vmem:[#allocation8 + $0x5a0] sm:$0xff]
    %v435 = vld [vmem:[#allocation8 + $0x5a8] sm:$0xff]
    %v436 = vld [vmem:[#allocation8 + $0x5b0] sm:$0xff]
    %v437 = vld [vmem:[#allocation8 + $0x5b8] sm:$0xff]
    %v438 = vld [vmem:[#allocation8 + $0x5c0] sm:$0xff]
    %v439 = vld [vmem:[#allocation8 + $0x5c8] sm:$0xff]
    %v440 = vld [vmem:[#allocation8 + $0x5d0] sm:$0xff]
    %v441 = vld [vmem:[#allocation8 + $0x5d8] sm:$0xff]
    %v442 = vld [vmem:[#allocation8 + $0x5e0] sm:$0xff]
    %v443 = vld [vmem:[#allocation8 + $0x5e8] sm:$0xff]
    %v444 = vld [vmem:[#allocation8 + $0x5f0] sm:$0xff]
    %v445 = vld [vmem:[#allocation8 + $0x5f8] sm:$0xff]
    %v446 = vld [vmem:[#allocation8 + $0x600] sm:$0xff]
    %v447 = vld [vmem:[#allocation8 + $0x608] sm:$0xff]
    %v448 = vld [vmem:[#allocation8 + $0x610] sm:$0xff]
    %v449 = vld [vmem:[#allocation8 + $0x618] sm:$0xff]
    %v450 = vld [vmem:[#allocation8 + $0x620] sm:$0xff]
    %v451 = vld [vmem:[#allocation8 + $0x628] sm:$0xff]
    %v452 = vld [vmem:[#allocation8 + $0x630] sm:$0xff]
    %v453 = vld [vmem:[#allocation8 + $0x638] sm:$0xff]
    %v454 = vld [vmem:[#allocation8 + $0x640] sm:$0xff]
    %v455 = vld [vmem:[#allocation8 + $0x648] sm:$0xff]
    %v456 = vld [vmem:[#allocation8 + $0x650] sm:$0xff]
    %v457 = vld [vmem:[#allocation8 + $0x658] sm:$0xff]
    %v458 = vld [vmem:[#allocation8 + $0x660] sm:$0xff]
    %v459 = vld [vmem:[#allocation8 + $0x668] sm:$0xff]
    %v460 = vld [vmem:[#allocation8 + $0x670] sm:$0xff]
    %v461 = vld [vmem:[#allocation8 + $0x678] sm:$0xff]
    %v462 = vld [vmem:[#allocation8 + $0x680] sm:$0xff]
    %v463 = vld [vmem:[#allocation8 + $0x688] sm:$0xff]
    %v464 = vld [vmem:[#allocation8 + $0x690] sm:$0xff]
    %v465 = vld [vmem:[#allocation8 + $0x698] sm:$0xff]
    %v466 = vld [vmem:[#allocation8 + $0x6a0] sm:$0xff]
    %v467 = vld [vmem:[#allocation8 + $0x6a8] sm:$0xff]
    %v468 = vld [vmem:[#allocation8 + $0x6b0] sm:$0xff]
    %v469 = vld [vmem:[#allocation8 + $0x6b8] sm:$0xff]
    %v470 = vld [vmem:[#allocation8 + $0x6c0] sm:$0xff]
    %v471 = vld [vmem:[#allocation8 + $0x6c8] sm:$0xff]
    %v472 = vld [vmem:[#allocation8 + $0x6d0] sm:$0xff]
    %v473 = vld [vmem:[#allocation8 + $0x6d8] sm:$0xff]
    %v474 = vld [vmem:[#allocation8 + $0x6e0] sm:$0xff]
    %v475 = vld [vmem:[#allocation8 + $0x6e8] sm:$0xff]
    %v476 = vld [vmem:[#allocation8 + $0x6f0] sm:$0xff]
    %v477 = vld [vmem:[#allocation8 + $0x6f8] sm:$0xff]
    %v478 = vld [vmem:[#allocation8 + $0x700] sm:$0xff]
    %v479 = vld [vmem:[#allocation8 + $0x708] sm:$0xff]
    %v480 = vld [vmem:[#allocation8 + $0x710] sm:$0xff]
    %v481 = vld [vmem:[#allocation8 + $0x718] sm:$0xff]
    %v482 = vld [vmem:[#allocation8 + $0x720] sm:$0xff]
    %v483 = vld [vmem:[#allocation8 + $0x728] sm:$0xff]
    %v484 = vld [vmem:[#allocation8 + $0x730] sm:$0xff]
    %v485 = vld [vmem:[#allocation8 + $0x738] sm:$0xff]
    %v486 = vld [vmem:[#allocation8 + $0x740] sm:$0xff]
    %v487 = vld [vmem:[#allocation8 + $0x748] sm:$0xff]
    %v488 = vld [vmem:[#allocation8 + $0x750] sm:$0xff]
    %v489 = vld [vmem:[#allocation8 + $0x758] sm:$0xff]
    %v490 = vld [vmem:[#allocation8 + $0x760] sm:$0xff]
    %v491 = vld [vmem:[#allocation8 + $0x768] sm:$0xff]
    %v492 = vld [vmem:[#allocation8 + $0x770] sm:$0xff]
    %v493 = vld [vmem:[#allocation8 + $0x778] sm:$0xff]
    %v494 = vld [vmem:[#allocation8 + $0x780] sm:$0xff]
    %v495 = vld [vmem:[#allocation8 + $0x788] sm:$0xff]
    %v496 = vld [vmem:[#allocation8 + $0x790] sm:$0xff]
    %v497 = vld [vmem:[#allocation8 + $0x798] sm:$0xff]
    %v498 = vld [vmem:[#allocation8 + $0x7a0] sm:$0xff]
    %v499 = vld [vmem:[#allocation8 + $0x7a8] sm:$0xff]
    %v500 = vld [vmem:[#allocation8 + $0x7b0] sm:$0xff]
    %v501 = vld [vmem:[#allocation8 + $0x7b8] sm:$0xff]
    %v502 = vld [vmem:[#allocation8 + $0x7c0] sm:$0xff]
    %v503 = vld [vmem:[#allocation8 + $0x7c8] sm:$0xff]
    %v504 = vld [vmem:[#allocation8 + $0x7d0] sm:$0xff]
    %v505 = vld [vmem:[#allocation8 + $0x7d8] sm:$0xff]
    %v506 = vld [vmem:[#allocation8 + $0x7e0] sm:$0xff]
    %v507 = vld [vmem:[#allocation8 + $0x7e8] sm:$0xff]
    %v508 = vld [vmem:[#allocation8 + $0x7f0] sm:$0xff]
    %v509 = vld [vmem:[#allocation8 + $0x7f8] sm:$0xff]
    %v510 = vld [vmem:[%s4] sm:$0xff]
    %v512 = vlaneseq
    %v513 = vshrl.u32 %v512, 7
    %v514 = vsub.s32 0, %v513
    %v515 = vrot.slane %v510, %v514
    %v516 = vlaneseq
    %v517 = vshrl.u32 %v516, 7
    %v518 = vsub.s32 1, %v517
    %v519 = vrot.slane %v510, %v518
    %v520 = vlaneseq
    %v521 = vshrl.u32 %v520, 7
    %v522 = vsub.s32 2, %v521
    %v523 = vrot.slane %v510, %v522
    %v524 = vlaneseq
    %v525 = vshrl.u32 %v524, 7
    %v526 = vsub.s32 3, %v525
    %v527 = vrot.slane %v510, %v526
    %v528 = vlaneseq
    %v529 = vshrl.u32 %v528, 7
    %v530 = vsub.s32 4, %v529
    %v531 = vrot.slane %v510, %v530
    %v532 = vlaneseq
    %v533 = vshrl.u32 %v532, 7
    %v534 = vsub.s32 5, %v533
    %v535 = vrot.slane %v510, %v534
    %v536 = vlaneseq
    %v537 = vshrl.u32 %v536, 7
    %v538 = vsub.s32 6, %v537
    %v539 = vrot.slane %v510, %v538
    %v540 = vlaneseq
    %v541 = vshrl.u32 %v540, 7
    %v542 = vsub.s32 7, %v541
    %v543 = vrot.slane %v510, %v542
    %v808 = vunpack.c.l.b16 %v254
    %v809 = vunpack.c.h.b16 %v254
    %v810 = vunpack.c.l.b16 %v255
    %v811 = vunpack.c.h.b16 %v255
    %v812 = vunpack.c.l.b16 %v256
    %v813 = vunpack.c.h.b16 %v256
    %v814 = vunpack.c.l.b16 %v257
    %v815 = vunpack.c.h.b16 %v257
    %v816 = vunpack.c.l.b16 %v258
    %v817 = vunpack.c.h.b16 %v258
    %v818 = vunpack.c.l.b16 %v259
    %v819 = vunpack.c.h.b16 %v259
    %v820 = vunpack.c.l.b16 %v260
    %v821 = vunpack.c.h.b16 %v260
    %v822 = vunpack.c.l.b16 %v261
    %v823 = vunpack.c.h.b16 %v261
    %v824 = vunpack.c.l.b16 %v262
    %v825 = vunpack.c.h.b16 %v262
    %v826 = vunpack.c.l.b16 %v263
    %v827 = vunpack.c.h.b16 %v263
    %v828 = vunpack.c.l.b16 %v264
    %v829 = vunpack.c.h.b16 %v264
    %v830 = vunpack.c.l.b16 %v265
    %v831 = vunpack.c.h.b16 %v265
    %v832 = vunpack.c.l.b16 %v266
    %v833 = vunpack.c.h.b16 %v266
    %v834 = vunpack.c.l.b16 %v267
    %v835 = vunpack.c.h.b16 %v267
    %v836 = vunpack.c.l.b16 %v268
    %v837 = vunpack.c.h.b16 %v268
    %v838 = vunpack.c.l.b16 %v269
    %v839 = vunpack.c.h.b16 %v269
    %v840 = vunpack.c.l.b16 %v270
    %v841 = vunpack.c.h.b16 %v270
    %v842 = vunpack.c.l.b16 %v271
    %v843 = vunpack.c.h.b16 %v271
    %v844 = vunpack.c.l.b16 %v272
    %v845 = vunpack.c.h.b16 %v272
    %v846 = vunpack.c.l.b16 %v273
    %v847 = vunpack.c.h.b16 %v273
    %v848 = vunpack.c.l.b16 %v274
    %v849 = vunpack.c.h.b16 %v274
    %v850 = vunpack.c.l.b16 %v275
    %v851 = vunpack.c.h.b16 %v275
    %v852 = vunpack.c.l.b16 %v276
    %v853 = vunpack.c.h.b16 %v276
    %v854 = vunpack.c.l.b16 %v277
    %v855 = vunpack.c.h.b16 %v277
    %v856 = vunpack.c.l.b16 %v278
    %v857 = vunpack.c.h.b16 %v278
    %v858 = vunpack.c.l.b16 %v279
    %v859 = vunpack.c.h.b16 %v279
    %v860 = vunpack.c.l.b16 %v280
    %v861 = vunpack.c.h.b16 %v280
    %v862 = vunpack.c.l.b16 %v281
    %v863 = vunpack.c.h.b16 %v281
    %v864 = vunpack.c.l.b16 %v282
    %v865 = vunpack.c.h.b16 %v282
    %v866 = vunpack.c.l.b16 %v283
    %v867 = vunpack.c.h.b16 %v283
    %v868 = vunpack.c.l.b16 %v284
    %v869 = vunpack.c.h.b16 %v284
    %v870 = vunpack.c.l.b16 %v285
    %v871 = vunpack.c.h.b16 %v285
    %v872 = vunpack.c.l.b16 %v286
    %v873 = vunpack.c.h.b16 %v286
    %v874 = vunpack.c.l.b16 %v287
    %v875 = vunpack.c.h.b16 %v287
    %v876 = vunpack.c.l.b16 %v288
    %v877 = vunpack.c.h.b16 %v288
    %v878 = vunpack.c.l.b16 %v289
    %v879 = vunpack.c.h.b16 %v289
    %v880 = vunpack.c.l.b16 %v290
    %v881 = vunpack.c.h.b16 %v290
    %v882 = vunpack.c.l.b16 %v291
    %v883 = vunpack.c.h.b16 %v291
    %v884 = vunpack.c.l.b16 %v292
    %v885 = vunpack.c.h.b16 %v292
    %v886 = vunpack.c.l.b16 %v293
    %v887 = vunpack.c.h.b16 %v293
    %v888 = vunpack.c.l.b16 %v294
    %v889 = vunpack.c.h.b16 %v294
    %v890 = vunpack.c.l.b16 %v295
    %v891 = vunpack.c.h.b16 %v295
    %v892 = vunpack.c.l.b16 %v296
    %v893 = vunpack.c.h.b16 %v296
    %v894 = vunpack.c.l.b16 %v297
    %v895 = vunpack.c.h.b16 %v297
    %v896 = vunpack.c.l.b16 %v298
    %v897 = vunpack.c.h.b16 %v298
    %v898 = vunpack.c.l.b16 %v299
    %v899 = vunpack.c.h.b16 %v299
    %v900 = vunpack.c.l.b16 %v300
    %v901 = vunpack.c.h.b16 %v300
    %v902 = vunpack.c.l.b16 %v301
    %v903 = vunpack.c.h.b16 %v301
    %v904 = vunpack.c.l.b16 %v302
    %v905 = vunpack.c.h.b16 %v302
    %v906 = vunpack.c.l.b16 %v303
    %v907 = vunpack.c.h.b16 %v303
    %v908 = vunpack.c.l.b16 %v304
    %v909 = vunpack.c.h.b16 %v304
    %v910 = vunpack.c.l.b16 %v305
    %v911 = vunpack.c.h.b16 %v305
    %v912 = vunpack.c.l.b16 %v306
    %v913 = vunpack.c.h.b16 %v306
    %v914 = vunpack.c.l.b16 %v307
    %v915 = vunpack.c.h.b16 %v307
    %v916 = vunpack.c.l.b16 %v308
    %v917 = vunpack.c.h.b16 %v308
    %v918 = vunpack.c.l.b16 %v309
    %v919 = vunpack.c.h.b16 %v309
    %v920 = vunpack.c.l.b16 %v310
    %v921 = vunpack.c.h.b16 %v310
    %v922 = vunpack.c.l.b16 %v311
    %v923 = vunpack.c.h.b16 %v311
    %v924 = vunpack.c.l.b16 %v312
    %v925 = vunpack.c.h.b16 %v312
    %v926 = vunpack.c.l.b16 %v313
    %v927 = vunpack.c.h.b16 %v313
    %v928 = vunpack.c.l.b16 %v314
    %v929 = vunpack.c.h.b16 %v314
    %v930 = vunpack.c.l.b16 %v315
    %v931 = vunpack.c.h.b16 %v315
    %v932 = vunpack.c.l.b16 %v316
    %v933 = vunpack.c.h.b16 %v316
    %v934 = vunpack.c.l.b16 %v317
    %v935 = vunpack.c.h.b16 %v317
    %v936 = vunpack.c.l.b16 %v318
    %v937 = vunpack.c.h.b16 %v318
    %v938 = vunpack.c.l.b16 %v319
    %v939 = vunpack.c.h.b16 %v319
    %v940 = vunpack.c.l.b16 %v320
    %v941 = vunpack.c.h.b16 %v320
    %v942 = vunpack.c.l.b16 %v321
    %v943 = vunpack.c.h.b16 %v321
    %v944 = vunpack.c.l.b16 %v322
    %v945 = vunpack.c.h.b16 %v322
    %v946 = vunpack.c.l.b16 %v323
    %v947 = vunpack.c.h.b16 %v323
    %v948 = vunpack.c.l.b16 %v324
    %v949 = vunpack.c.h.b16 %v324
    %v950 = vunpack.c.l.b16 %v325
    %v951 = vunpack.c.h.b16 %v325
    %v952 = vunpack.c.l.b16 %v326
    %v953 = vunpack.c.h.b16 %v326
    %v954 = vunpack.c.l.b16 %v327
    %v955 = vunpack.c.h.b16 %v327
    %v956 = vunpack.c.l.b16 %v328
    %v957 = vunpack.c.h.b16 %v328
    %v958 = vunpack.c.l.b16 %v329
    %v959 = vunpack.c.h.b16 %v329
    %v960 = vunpack.c.l.b16 %v330
    %v961 = vunpack.c.h.b16 %v330
    %v962 = vunpack.c.l.b16 %v331
    %v963 = vunpack.c.h.b16 %v331
    %v964 = vunpack.c.l.b16 %v332
    %v965 = vunpack.c.h.b16 %v332
    %v966 = vunpack.c.l.b16 %v333
    %v967 = vunpack.c.h.b16 %v333
    %v968 = vunpack.c.l.b16 %v334
    %v969 = vunpack.c.h.b16 %v334
    %v970 = vunpack.c.l.b16 %v335
    %v971 = vunpack.c.h.b16 %v335
    %v972 = vunpack.c.l.b16 %v336
    %v973 = vunpack.c.h.b16 %v336
    %v974 = vunpack.c.l.b16 %v337
    %v975 = vunpack.c.h.b16 %v337
    %v976 = vunpack.c.l.b16 %v338
    %v977 = vunpack.c.h.b16 %v338
    %v978 = vunpack.c.l.b16 %v339
    %v979 = vunpack.c.h.b16 %v339
    %v980 = vunpack.c.l.b16 %v340
    %v981 = vunpack.c.h.b16 %v340
    %v982 = vunpack.c.l.b16 %v341
    %v983 = vunpack.c.h.b16 %v341
    %v984 = vunpack.c.l.b16 %v342
    %v985 = vunpack.c.h.b16 %v342
    %v986 = vunpack.c.l.b16 %v343
    %v987 = vunpack.c.h.b16 %v343
    %v988 = vunpack.c.l.b16 %v344
    %v989 = vunpack.c.h.b16 %v344
    %v990 = vunpack.c.l.b16 %v345
    %v991 = vunpack.c.h.b16 %v345
    %v992 = vunpack.c.l.b16 %v346
    %v993 = vunpack.c.h.b16 %v346
    %v994 = vunpack.c.l.b16 %v347
    %v995 = vunpack.c.h.b16 %v347
    %v996 = vunpack.c.l.b16 %v348
    %v997 = vunpack.c.h.b16 %v348
    %v998 = vunpack.c.l.b16 %v349
    %v999 = vunpack.c.h.b16 %v349
    %v1000 = vunpack.c.l.b16 %v350
    %v1001 = vunpack.c.h.b16 %v350
    %v1002 = vunpack.c.l.b16 %v351
    %v1003 = vunpack.c.h.b16 %v351
    %v1004 = vunpack.c.l.b16 %v352
    %v1005 = vunpack.c.h.b16 %v352
    %v1006 = vunpack.c.l.b16 %v353
    %v1007 = vunpack.c.h.b16 %v353
    %v1008 = vunpack.c.l.b16 %v354
    %v1009 = vunpack.c.h.b16 %v354
    %v1010 = vunpack.c.l.b16 %v355
    %v1011 = vunpack.c.h.b16 %v355
    %v1012 = vunpack.c.l.b16 %v356
    %v1013 = vunpack.c.h.b16 %v356
    %v1014 = vunpack.c.l.b16 %v357
    %v1015 = vunpack.c.h.b16 %v357
    %v1016 = vunpack.c.l.b16 %v358
    %v1017 = vunpack.c.h.b16 %v358
    %v1018 = vunpack.c.l.b16 %v359
    %v1019 = vunpack.c.h.b16 %v359
    %v1020 = vunpack.c.l.b16 %v360
    %v1021 = vunpack.c.h.b16 %v360
    %v1022 = vunpack.c.l.b16 %v361
    %v1023 = vunpack.c.h.b16 %v361
    %v1024 = vunpack.c.l.b16 %v362
    %v1025 = vunpack.c.h.b16 %v362
    %v1026 = vunpack.c.l.b16 %v363
    %v1027 = vunpack.c.h.b16 %v363
    %v1028 = vunpack.c.l.b16 %v364
    %v1029 = vunpack.c.h.b16 %v364
    %v1030 = vunpack.c.l.b16 %v365
    %v1031 = vunpack.c.h.b16 %v365
    %v1032 = vunpack.c.l.b16 %v366
    %v1033 = vunpack.c.h.b16 %v366
    %v1034 = vunpack.c.l.b16 %v367
    %v1035 = vunpack.c.h.b16 %v367
    %v1036 = vunpack.c.l.b16 %v368
    %v1037 = vunpack.c.h.b16 %v368
    %v1038 = vunpack.c.l.b16 %v369
    %v1039 = vunpack.c.h.b16 %v369
    %v1040 = vunpack.c.l.b16 %v370
    %v1041 = vunpack.c.h.b16 %v370
    %v1042 = vunpack.c.l.b16 %v371
    %v1043 = vunpack.c.h.b16 %v371
    %v1044 = vunpack.c.l.b16 %v372
    %v1045 = vunpack.c.h.b16 %v372
    %v1046 = vunpack.c.l.b16 %v373
    %v1047 = vunpack.c.h.b16 %v373
    %v1048 = vunpack.c.l.b16 %v374
    %v1049 = vunpack.c.h.b16 %v374
    %v1050 = vunpack.c.l.b16 %v375
    %v1051 = vunpack.c.h.b16 %v375
    %v1052 = vunpack.c.l.b16 %v376
    %v1053 = vunpack.c.h.b16 %v376
    %v1054 = vunpack.c.l.b16 %v377
    %v1055 = vunpack.c.h.b16 %v377
    %v1056 = vunpack.c.l.b16 %v378
    %v1057 = vunpack.c.h.b16 %v378
    %v1058 = vunpack.c.l.b16 %v379
    %v1059 = vunpack.c.h.b16 %v379
    %v1060 = vunpack.c.l.b16 %v380
    %v1061 = vunpack.c.h.b16 %v380
    %v1062 = vunpack.c.l.b16 %v381
    %v1063 = vunpack.c.h.b16 %v381
    %v1064 = vunpack.c.l.b16 %v382
    %v1065 = vunpack.c.h.b16 %v382
    %v1066 = vunpack.c.l.b16 %v383
    %v1067 = vunpack.c.h.b16 %v383
    %v1068 = vunpack.c.l.b16 %v384
    %v1069 = vunpack.c.h.b16 %v384
    %v1070 = vunpack.c.l.b16 %v385
    %v1071 = vunpack.c.h.b16 %v385
    %v1072 = vunpack.c.l.b16 %v386
    %v1073 = vunpack.c.h.b16 %v386
    %v1074 = vunpack.c.l.b16 %v387
    %v1075 = vunpack.c.h.b16 %v387
    %v1076 = vunpack.c.l.b16 %v388
    %v1077 = vunpack.c.h.b16 %v388
    %v1078 = vunpack.c.l.b16 %v389
    %v1079 = vunpack.c.h.b16 %v389
    %v1080 = vunpack.c.l.b16 %v390
    %v1081 = vunpack.c.h.b16 %v390
    %v1082 = vunpack.c.l.b16 %v391
    %v1083 = vunpack.c.h.b16 %v391
    %v1084 = vunpack.c.l.b16 %v392
    %v1085 = vunpack.c.h.b16 %v392
    %v1086 = vunpack.c.l.b16 %v393
    %v1087 = vunpack.c.h.b16 %v393
    %v1088 = vunpack.c.l.b16 %v394
    %v1089 = vunpack.c.h.b16 %v394
    %v1090 = vunpack.c.l.b16 %v395
    %v1091 = vunpack.c.h.b16 %v395
    %v1092 = vunpack.c.l.b16 %v396
    %v1093 = vunpack.c.h.b16 %v396
    %v1094 = vunpack.c.l.b16 %v397
    %v1095 = vunpack.c.h.b16 %v397
    %v1096 = vunpack.c.l.b16 %v398
    %v1097 = vunpack.c.h.b16 %v398
    %v1098 = vunpack.c.l.b16 %v399
    %v1099 = vunpack.c.h.b16 %v399
    %v1100 = vunpack.c.l.b16 %v400
    %v1101 = vunpack.c.h.b16 %v400
    %v1102 = vunpack.c.l.b16 %v401
    %v1103 = vunpack.c.h.b16 %v401
    %v1104 = vunpack.c.l.b16 %v402
    %v1105 = vunpack.c.h.b16 %v402
    %v1106 = vunpack.c.l.b16 %v403
    %v1107 = vunpack.c.h.b16 %v403
    %v1108 = vunpack.c.l.b16 %v404
    %v1109 = vunpack.c.h.b16 %v404
    %v1110 = vunpack.c.l.b16 %v405
    %v1111 = vunpack.c.h.b16 %v405
    %v1112 = vunpack.c.l.b16 %v406
    %v1113 = vunpack.c.h.b16 %v406
    %v1114 = vunpack.c.l.b16 %v407
    %v1115 = vunpack.c.h.b16 %v407
    %v1116 = vunpack.c.l.b16 %v408
    %v1117 = vunpack.c.h.b16 %v408
    %v1118 = vunpack.c.l.b16 %v409
    %v1119 = vunpack.c.h.b16 %v409
    %v1120 = vunpack.c.l.b16 %v410
    %v1121 = vunpack.c.h.b16 %v410
    %v1122 = vunpack.c.l.b16 %v411
    %v1123 = vunpack.c.h.b16 %v411
    %v1124 = vunpack.c.l.b16 %v412
    %v1125 = vunpack.c.h.b16 %v412
    %v1126 = vunpack.c.l.b16 %v413
    %v1127 = vunpack.c.h.b16 %v413
    %v1128 = vunpack.c.l.b16 %v414
    %v1129 = vunpack.c.h.b16 %v414
    %v1130 = vunpack.c.l.b16 %v415
    %v1131 = vunpack.c.h.b16 %v415
    %v1132 = vunpack.c.l.b16 %v416
    %v1133 = vunpack.c.h.b16 %v416
    %v1134 = vunpack.c.l.b16 %v417
    %v1135 = vunpack.c.h.b16 %v417
    %v1136 = vunpack.c.l.b16 %v418
    %v1137 = vunpack.c.h.b16 %v418
    %v1138 = vunpack.c.l.b16 %v419
    %v1139 = vunpack.c.h.b16 %v419
    %v1140 = vunpack.c.l.b16 %v420
    %v1141 = vunpack.c.h.b16 %v420
    %v1142 = vunpack.c.l.b16 %v421
    %v1143 = vunpack.c.h.b16 %v421
    %v1144 = vunpack.c.l.b16 %v422
    %v1145 = vunpack.c.h.b16 %v422
    %v1146 = vunpack.c.l.b16 %v423
    %v1147 = vunpack.c.h.b16 %v423
    %v1148 = vunpack.c.l.b16 %v424
    %v1149 = vunpack.c.h.b16 %v424
    %v1150 = vunpack.c.l.b16 %v425
    %v1151 = vunpack.c.h.b16 %v425
    %v1152 = vunpack.c.l.b16 %v426
    %v1153 = vunpack.c.h.b16 %v426
    %v1154 = vunpack.c.l.b16 %v427
    %v1155 = vunpack.c.h.b16 %v427
    %v1156 = vunpack.c.l.b16 %v428
    %v1157 = vunpack.c.h.b16 %v428
    %v1158 = vunpack.c.l.b16 %v429
    %v1159 = vunpack.c.h.b16 %v429
    %v1160 = vunpack.c.l.b16 %v430
    %v1161 = vunpack.c.h.b16 %v430
    %v1162 = vunpack.c.l.b16 %v431
    %v1163 = vunpack.c.h.b16 %v431
    %v1164 = vunpack.c.l.b16 %v432
    %v1165 = vunpack.c.h.b16 %v432
    %v1166 = vunpack.c.l.b16 %v433
    %v1167 = vunpack.c.h.b16 %v433
    %v1168 = vunpack.c.l.b16 %v434
    %v1169 = vunpack.c.h.b16 %v434
    %v1170 = vunpack.c.l.b16 %v435
    %v1171 = vunpack.c.h.b16 %v435
    %v1172 = vunpack.c.l.b16 %v436
    %v1173 = vunpack.c.h.b16 %v436
    %v1174 = vunpack.c.l.b16 %v437
    %v1175 = vunpack.c.h.b16 %v437
    %v1176 = vunpack.c.l.b16 %v438
    %v1177 = vunpack.c.h.b16 %v438
    %v1178 = vunpack.c.l.b16 %v439
    %v1179 = vunpack.c.h.b16 %v439
    %v1180 = vunpack.c.l.b16 %v440
    %v1181 = vunpack.c.h.b16 %v440
    %v1182 = vunpack.c.l.b16 %v441
    %v1183 = vunpack.c.h.b16 %v441
    %v1184 = vunpack.c.l.b16 %v442
    %v1185 = vunpack.c.h.b16 %v442
    %v1186 = vunpack.c.l.b16 %v443
    %v1187 = vunpack.c.h.b16 %v443
    %v1188 = vunpack.c.l.b16 %v444
    %v1189 = vunpack.c.h.b16 %v444
    %v1190 = vunpack.c.l.b16 %v445
    %v1191 = vunpack.c.h.b16 %v445
    %v1192 = vunpack.c.l.b16 %v446
    %v1193 = vunpack.c.h.b16 %v446
    %v1194 = vunpack.c.l.b16 %v447
    %v1195 = vunpack.c.h.b16 %v447
    %v1196 = vunpack.c.l.b16 %v448
    %v1197 = vunpack.c.h.b16 %v448
    %v1198 = vunpack.c.l.b16 %v449
    %v1199 = vunpack.c.h.b16 %v449
    %v1200 = vunpack.c.l.b16 %v450
    %v1201 = vunpack.c.h.b16 %v450
    %v1202 = vunpack.c.l.b16 %v451
    %v1203 = vunpack.c.h.b16 %v451
    %v1204 = vunpack.c.l.b16 %v452
    %v1205 = vunpack.c.h.b16 %v452
    %v1206 = vunpack.c.l.b16 %v453
    %v1207 = vunpack.c.h.b16 %v453
    %v1208 = vunpack.c.l.b16 %v454
    %v1209 = vunpack.c.h.b16 %v454
    %v1210 = vunpack.c.l.b16 %v455
    %v1211 = vunpack.c.h.b16 %v455
    %v1212 = vunpack.c.l.b16 %v456
    %v1213 = vunpack.c.h.b16 %v456
    %v1214 = vunpack.c.l.b16 %v457
    %v1215 = vunpack.c.h.b16 %v457
    %v1216 = vunpack.c.l.b16 %v458
    %v1217 = vunpack.c.h.b16 %v458
    %v1218 = vunpack.c.l.b16 %v459
    %v1219 = vunpack.c.h.b16 %v459
    %v1220 = vunpack.c.l.b16 %v460
    %v1221 = vunpack.c.h.b16 %v460
    %v1222 = vunpack.c.l.b16 %v461
    %v1223 = vunpack.c.h.b16 %v461
    %v1224 = vunpack.c.l.b16 %v462
    %v1225 = vunpack.c.h.b16 %v462
    %v1226 = vunpack.c.l.b16 %v463
    %v1227 = vunpack.c.h.b16 %v463
    %v1228 = vunpack.c.l.b16 %v464
    %v1229 = vunpack.c.h.b16 %v464
    %v1230 = vunpack.c.l.b16 %v465
    %v1231 = vunpack.c.h.b16 %v465
    %v1232 = vunpack.c.l.b16 %v466
    %v1233 = vunpack.c.h.b16 %v466
    %v1234 = vunpack.c.l.b16 %v467
    %v1235 = vunpack.c.h.b16 %v467
    %v1236 = vunpack.c.l.b16 %v468
    %v1237 = vunpack.c.h.b16 %v468
    %v1238 = vunpack.c.l.b16 %v469
    %v1239 = vunpack.c.h.b16 %v469
    %v1240 = vunpack.c.l.b16 %v470
    %v1241 = vunpack.c.h.b16 %v470
    %v1242 = vunpack.c.l.b16 %v471
    %v1243 = vunpack.c.h.b16 %v471
    %v1244 = vunpack.c.l.b16 %v472
    %v1245 = vunpack.c.h.b16 %v472
    %v1246 = vunpack.c.l.b16 %v473
    %v1247 = vunpack.c.h.b16 %v473
    %v1248 = vunpack.c.l.b16 %v474
    %v1249 = vunpack.c.h.b16 %v474
    %v1250 = vunpack.c.l.b16 %v475
    %v1251 = vunpack.c.h.b16 %v475
    %v1252 = vunpack.c.l.b16 %v476
    %v1253 = vunpack.c.h.b16 %v476
    %v1254 = vunpack.c.l.b16 %v477
    %v1255 = vunpack.c.h.b16 %v477
    %v1256 = vunpack.c.l.b16 %v478
    %v1257 = vunpack.c.h.b16 %v478
    %v1258 = vunpack.c.l.b16 %v479
    %v1259 = vunpack.c.h.b16 %v479
    %v1260 = vunpack.c.l.b16 %v480
    %v1261 = vunpack.c.h.b16 %v480
    %v1262 = vunpack.c.l.b16 %v481
    %v1263 = vunpack.c.h.b16 %v481
    %v1264 = vunpack.c.l.b16 %v482
    %v1265 = vunpack.c.h.b16 %v482
    %v1266 = vunpack.c.l.b16 %v483
    %v1267 = vunpack.c.h.b16 %v483
    %v1268 = vunpack.c.l.b16 %v484
    %v1269 = vunpack.c.h.b16 %v484
    %v1270 = vunpack.c.l.b16 %v485
    %v1271 = vunpack.c.h.b16 %v485
    %v1272 = vunpack.c.l.b16 %v486
    %v1273 = vunpack.c.h.b16 %v486
    %v1274 = vunpack.c.l.b16 %v487
    %v1275 = vunpack.c.h.b16 %v487
    %v1276 = vunpack.c.l.b16 %v488
    %v1277 = vunpack.c.h.b16 %v488
    %v1278 = vunpack.c.l.b16 %v489
    %v1279 = vunpack.c.h.b16 %v489
    %v1280 = vunpack.c.l.b16 %v490
    %v1281 = vunpack.c.h.b16 %v490
    %v1282 = vunpack.c.l.b16 %v491
    %v1283 = vunpack.c.h.b16 %v491
    %v1284 = vunpack.c.l.b16 %v492
    %v1285 = vunpack.c.h.b16 %v492
    %v1286 = vunpack.c.l.b16 %v493
    %v1287 = vunpack.c.h.b16 %v493
    %v1288 = vunpack.c.l.b16 %v494
    %v1289 = vunpack.c.h.b16 %v494
    %v1290 = vunpack.c.l.b16 %v495
    %v1291 = vunpack.c.h.b16 %v495
    %v1292 = vunpack.c.l.b16 %v496
    %v1293 = vunpack.c.h.b16 %v496
    %v1294 = vunpack.c.l.b16 %v497
    %v1295 = vunpack.c.h.b16 %v497
    %v1296 = vunpack.c.l.b16 %v498
    %v1297 = vunpack.c.h.b16 %v498
    %v1298 = vunpack.c.l.b16 %v499
    %v1299 = vunpack.c.h.b16 %v499
    %v1300 = vunpack.c.l.b16 %v500
    %v1301 = vunpack.c.h.b16 %v500
    %v1302 = vunpack.c.l.b16 %v501
    %v1303 = vunpack.c.h.b16 %v501
    %v1304 = vunpack.c.l.b16 %v502
    %v1305 = vunpack.c.h.b16 %v502
    %v1306 = vunpack.c.l.b16 %v503
    %v1307 = vunpack.c.h.b16 %v503
    %v1308 = vunpack.c.l.b16 %v504
    %v1309 = vunpack.c.h.b16 %v504
    %v1310 = vunpack.c.l.b16 %v505
    %v1311 = vunpack.c.h.b16 %v505
    %v1312 = vunpack.c.l.b16 %v506
    %v1313 = vunpack.c.h.b16 %v506
    %v1314 = vunpack.c.l.b16 %v507
    %v1315 = vunpack.c.h.b16 %v507
    %v1316 = vunpack.c.l.b16 %v508
    %v1317 = vunpack.c.h.b16 %v508
    %v1318 = vunpack.c.l.b16 %v509
    %v1319 = vunpack.c.h.b16 %v509
    %v1320 = vpack.c.b16 %v816, %v808
    %v1321 = vpack.c.b16 %v817, %v809
    %v1322 = vpack.c.b16 %v818, %v810
    %v1323 = vpack.c.b16 %v819, %v811
    %v1324 = vpack.c.b16 %v820, %v812
    %v1325 = vpack.c.b16 %v821, %v813
    %v1326 = vpack.c.b16 %v822, %v814
    %v1327 = vpack.c.b16 %v823, %v815
    %v1328 = vpack.c.b16 %v832, %v824
    %v1329 = vpack.c.b16 %v833, %v825
    %v1330 = vpack.c.b16 %v834, %v826
    %v1331 = vpack.c.b16 %v835, %v827
    %v1332 = vpack.c.b16 %v836, %v828
    %v1333 = vpack.c.b16 %v837, %v829
    %v1334 = vpack.c.b16 %v838, %v830
    %v1335 = vpack.c.b16 %v839, %v831
    %v1336 = vpack.c.b16 %v848, %v840
    %v1337 = vpack.c.b16 %v849, %v841
    %v1338 = vpack.c.b16 %v850, %v842
    %v1339 = vpack.c.b16 %v851, %v843
    %v1340 = vpack.c.b16 %v852, %v844
    %v1341 = vpack.c.b16 %v853, %v845
    %v1342 = vpack.c.b16 %v854, %v846
    %v1343 = vpack.c.b16 %v855, %v847
    %v1344 = vpack.c.b16 %v864, %v856
    %v1345 = vpack.c.b16 %v865, %v857
    %v1346 = vpack.c.b16 %v866, %v858
    %v1347 = vpack.c.b16 %v867, %v859
    %v1348 = vpack.c.b16 %v868, %v860
    %v1349 = vpack.c.b16 %v869, %v861
    %v1350 = vpack.c.b16 %v870, %v862
    %v1351 = vpack.c.b16 %v871, %v863
    %v1352 = vpack.c.b16 %v880, %v872
    %v1353 = vpack.c.b16 %v881, %v873
    %v1354 = vpack.c.b16 %v882, %v874
    %v1355 = vpack.c.b16 %v883, %v875
    %v1356 = vpack.c.b16 %v884, %v876
    %v1357 = vpack.c.b16 %v885, %v877
    %v1358 = vpack.c.b16 %v886, %v878
    %v1359 = vpack.c.b16 %v887, %v879
    %v1360 = vpack.c.b16 %v896, %v888
    %v1361 = vpack.c.b16 %v897, %v889
    %v1362 = vpack.c.b16 %v898, %v890
    %v1363 = vpack.c.b16 %v899, %v891
    %v1364 = vpack.c.b16 %v900, %v892
    %v1365 = vpack.c.b16 %v901, %v893
    %v1366 = vpack.c.b16 %v902, %v894
    %v1367 = vpack.c.b16 %v903, %v895
    %v1368 = vpack.c.b16 %v912, %v904
    %v1369 = vpack.c.b16 %v913, %v905
    %v1370 = vpack.c.b16 %v914, %v906
    %v1371 = vpack.c.b16 %v915, %v907
    %v1372 = vpack.c.b16 %v916, %v908
    %v1373 = vpack.c.b16 %v917, %v909
    %v1374 = vpack.c.b16 %v918, %v910
    %v1375 = vpack.c.b16 %v919, %v911
    %v1376 = vpack.c.b16 %v928, %v920
    %v1377 = vpack.c.b16 %v929, %v921
    %v1378 = vpack.c.b16 %v930, %v922
    %v1379 = vpack.c.b16 %v931, %v923
    %v1380 = vpack.c.b16 %v932, %v924
    %v1381 = vpack.c.b16 %v933, %v925
    %v1382 = vpack.c.b16 %v934, %v926
    %v1383 = vpack.c.b16 %v935, %v927
    %v1384 = vpack.c.b16 %v944, %v936
    %v1385 = vpack.c.b16 %v945, %v937
    %v1386 = vpack.c.b16 %v946, %v938
    %v1387 = vpack.c.b16 %v947, %v939
    %v1388 = vpack.c.b16 %v948, %v940
    %v1389 = vpack.c.b16 %v949, %v941
    %v1390 = vpack.c.b16 %v950, %v942
    %v1391 = vpack.c.b16 %v951, %v943
    %v1392 = vpack.c.b16 %v960, %v952
    %v1393 = vpack.c.b16 %v961, %v953
    %v1394 = vpack.c.b16 %v962, %v954
    %v1395 = vpack.c.b16 %v963, %v955
    %v1396 = vpack.c.b16 %v964, %v956
    %v1397 = vpack.c.b16 %v965, %v957
    %v1398 = vpack.c.b16 %v966, %v958
    %v1399 = vpack.c.b16 %v967, %v959
    %v1400 = vpack.c.b16 %v976, %v968
    %v1401 = vpack.c.b16 %v977, %v969
    %v1402 = vpack.c.b16 %v978, %v970
    %v1403 = vpack.c.b16 %v979, %v971
    %v1404 = vpack.c.b16 %v980, %v972
    %v1405 = vpack.c.b16 %v981, %v973
    %v1406 = vpack.c.b16 %v982, %v974
    %v1407 = vpack.c.b16 %v983, %v975
    %v1408 = vpack.c.b16 %v992, %v984
    %v1409 = vpack.c.b16 %v993, %v985
    %v1410 = vpack.c.b16 %v994, %v986
    %v1411 = vpack.c.b16 %v995, %v987
    %v1412 = vpack.c.b16 %v996, %v988
    %v1413 = vpack.c.b16 %v997, %v989
    %v1414 = vpack.c.b16 %v998, %v990
    %v1415 = vpack.c.b16 %v999, %v991
    %v1416 = vpack.c.b16 %v1008, %v1000
    %v1417 = vpack.c.b16 %v1009, %v1001
    %v1418 = vpack.c.b16 %v1010, %v1002
    %v1419 = vpack.c.b16 %v1011, %v1003
    %v1420 = vpack.c.b16 %v1012, %v1004
    %v1421 = vpack.c.b16 %v1013, %v1005
    %v1422 = vpack.c.b16 %v1014, %v1006
    %v1423 = vpack.c.b16 %v1015, %v1007
    %v1424 = vpack.c.b16 %v1024, %v1016
    %v1425 = vpack.c.b16 %v1025, %v1017
    %v1426 = vpack.c.b16 %v1026, %v1018
    %v1427 = vpack.c.b16 %v1027, %v1019
    %v1428 = vpack.c.b16 %v1028, %v1020
    %v1429 = vpack.c.b16 %v1029, %v1021
    %v1430 = vpack.c.b16 %v1030, %v1022
    %v1431 = vpack.c.b16 %v1031, %v1023
    %v1432 = vpack.c.b16 %v1040, %v1032
    %v1433 = vpack.c.b16 %v1041, %v1033
    %v1434 = vpack.c.b16 %v1042, %v1034
    %v1435 = vpack.c.b16 %v1043, %v1035
    %v1436 = vpack.c.b16 %v1044, %v1036
    %v1437 = vpack.c.b16 %v1045, %v1037
    %v1438 = vpack.c.b16 %v1046, %v1038
    %v1439 = vpack.c.b16 %v1047, %v1039
    %v1440 = vpack.c.b16 %v1056, %v1048
    %v1441 = vpack.c.b16 %v1057, %v1049
    %v1442 = vpack.c.b16 %v1058, %v1050
    %v1443 = vpack.c.b16 %v1059, %v1051
    %v1444 = vpack.c.b16 %v1060, %v1052
    %v1445 = vpack.c.b16 %v1061, %v1053
    %v1446 = vpack.c.b16 %v1062, %v1054
    %v1447 = vpack.c.b16 %v1063, %v1055
    %v1448 = vpack.c.b16 %v1072, %v1064
    %v1449 = vpack.c.b16 %v1073, %v1065
    %v1450 = vpack.c.b16 %v1074, %v1066
    %v1451 = vpack.c.b16 %v1075, %v1067
    %v1452 = vpack.c.b16 %v1076, %v1068
    %v1453 = vpack.c.b16 %v1077, %v1069
    %v1454 = vpack.c.b16 %v1078, %v1070
    %v1455 = vpack.c.b16 %v1079, %v1071
    %v1456 = vpack.c.b16 %v1088, %v1080
    %v1457 = vpack.c.b16 %v1089, %v1081
    %v1458 = vpack.c.b16 %v1090, %v1082
    %v1459 = vpack.c.b16 %v1091, %v1083
    %v1460 = vpack.c.b16 %v1092, %v1084
    %v1461 = vpack.c.b16 %v1093, %v1085
    %v1462 = vpack.c.b16 %v1094, %v1086
    %v1463 = vpack.c.b16 %v1095, %v1087
    %v1464 = vpack.c.b16 %v1104, %v1096
    %v1465 = vpack.c.b16 %v1105, %v1097
    %v1466 = vpack.c.b16 %v1106, %v1098
    %v1467 = vpack.c.b16 %v1107, %v1099
    %v1468 = vpack.c.b16 %v1108, %v1100
    %v1469 = vpack.c.b16 %v1109, %v1101
    %v1470 = vpack.c.b16 %v1110, %v1102
    %v1471 = vpack.c.b16 %v1111, %v1103
    %v1472 = vpack.c.b16 %v1120, %v1112
    %v1473 = vpack.c.b16 %v1121, %v1113
    %v1474 = vpack.c.b16 %v1122, %v1114
    %v1475 = vpack.c.b16 %v1123, %v1115
    %v1476 = vpack.c.b16 %v1124, %v1116
    %v1477 = vpack.c.b16 %v1125, %v1117
    %v1478 = vpack.c.b16 %v1126, %v1118
    %v1479 = vpack.c.b16 %v1127, %v1119
    %v1480 = vpack.c.b16 %v1136, %v1128
    %v1481 = vpack.c.b16 %v1137, %v1129
    %v1482 = vpack.c.b16 %v1138, %v1130
    %v1483 = vpack.c.b16 %v1139, %v1131
    %v1484 = vpack.c.b16 %v1140, %v1132
    %v1485 = vpack.c.b16 %v1141, %v1133
    %v1486 = vpack.c.b16 %v1142, %v1134
    %v1487 = vpack.c.b16 %v1143, %v1135
    %v1488 = vpack.c.b16 %v1152, %v1144
    %v1489 = vpack.c.b16 %v1153, %v1145
    %v1490 = vpack.c.b16 %v1154, %v1146
    %v1491 = vpack.c.b16 %v1155, %v1147
    %v1492 = vpack.c.b16 %v1156, %v1148
    %v1493 = vpack.c.b16 %v1157, %v1149
    %v1494 = vpack.c.b16 %v1158, %v1150
    %v1495 = vpack.c.b16 %v1159, %v1151
    %v1496 = vpack.c.b16 %v1168, %v1160
    %v1497 = vpack.c.b16 %v1169, %v1161
    %v1498 = vpack.c.b16 %v1170, %v1162
    %v1499 = vpack.c.b16 %v1171, %v1163
    %v1500 = vpack.c.b16 %v1172, %v1164
    %v1501 = vpack.c.b16 %v1173, %v1165
    %v1502 = vpack.c.b16 %v1174, %v1166
    %v1503 = vpack.c.b16 %v1175, %v1167
    %v1504 = vpack.c.b16 %v1184, %v1176
    %v1505 = vpack.c.b16 %v1185, %v1177
    %v1506 = vpack.c.b16 %v1186, %v1178
    %v1507 = vpack.c.b16 %v1187, %v1179
    %v1508 = vpack.c.b16 %v1188, %v1180
    %v1509 = vpack.c.b16 %v1189, %v1181
    %v1510 = vpack.c.b16 %v1190, %v1182
    %v1511 = vpack.c.b16 %v1191, %v1183
    %v1512 = vpack.c.b16 %v1200, %v1192
    %v1513 = vpack.c.b16 %v1201, %v1193
    %v1514 = vpack.c.b16 %v1202, %v1194
    %v1515 = vpack.c.b16 %v1203, %v1195
    %v1516 = vpack.c.b16 %v1204, %v1196
    %v1517 = vpack.c.b16 %v1205, %v1197
    %v1518 = vpack.c.b16 %v1206, %v1198
    %v1519 = vpack.c.b16 %v1207, %v1199
    %v1520 = vpack.c.b16 %v1216, %v1208
    %v1521 = vpack.c.b16 %v1217, %v1209
    %v1522 = vpack.c.b16 %v1218, %v1210
    %v1523 = vpack.c.b16 %v1219, %v1211
    %v1524 = vpack.c.b16 %v1220, %v1212
    %v1525 = vpack.c.b16 %v1221, %v1213
    %v1526 = vpack.c.b16 %v1222, %v1214
    %v1527 = vpack.c.b16 %v1223, %v1215
    %v1528 = vpack.c.b16 %v1232, %v1224
    %v1529 = vpack.c.b16 %v1233, %v1225
    %v1530 = vpack.c.b16 %v1234, %v1226
    %v1531 = vpack.c.b16 %v1235, %v1227
    %v1532 = vpack.c.b16 %v1236, %v1228
    %v1533 = vpack.c.b16 %v1237, %v1229
    %v1534 = vpack.c.b16 %v1238, %v1230
    %v1535 = vpack.c.b16 %v1239, %v1231
    %v1536 = vpack.c.b16 %v1248, %v1240
    %v1537 = vpack.c.b16 %v1249, %v1241
    %v1538 = vpack.c.b16 %v1250, %v1242
    %v1539 = vpack.c.b16 %v1251, %v1243
    %v1540 = vpack.c.b16 %v1252, %v1244
    %v1541 = vpack.c.b16 %v1253, %v1245
    %v1542 = vpack.c.b16 %v1254, %v1246
    %v1543 = vpack.c.b16 %v1255, %v1247
    %v1544 = vpack.c.b16 %v1264, %v1256
    %v1545 = vpack.c.b16 %v1265, %v1257
    %v1546 = vpack.c.b16 %v1266, %v1258
    %v1547 = vpack.c.b16 %v1267, %v1259
    %v1548 = vpack.c.b16 %v1268, %v1260
    %v1549 = vpack.c.b16 %v1269, %v1261
    %v1550 = vpack.c.b16 %v1270, %v1262
    %v1551 = vpack.c.b16 %v1271, %v1263
    %v1552 = vpack.c.b16 %v1280, %v1272
    %v1553 = vpack.c.b16 %v1281, %v1273
    %v1554 = vpack.c.b16 %v1282, %v1274
    %v1555 = vpack.c.b16 %v1283, %v1275
    %v1556 = vpack.c.b16 %v1284, %v1276
    %v1557 = vpack.c.b16 %v1285, %v1277
    %v1558 = vpack.c.b16 %v1286, %v1278
    %v1559 = vpack.c.b16 %v1287, %v1279
    %v1560 = vpack.c.b16 %v1296, %v1288
    %v1561 = vpack.c.b16 %v1297, %v1289
    %v1562 = vpack.c.b16 %v1298, %v1290
    %v1563 = vpack.c.b16 %v1299, %v1291
    %v1564 = vpack.c.b16 %v1300, %v1292
    %v1565 = vpack.c.b16 %v1301, %v1293
    %v1566 = vpack.c.b16 %v1302, %v1294
    %v1567 = vpack.c.b16 %v1303, %v1295
    %v1568 = vpack.c.b16 %v1312, %v1304
    %v1569 = vpack.c.b16 %v1313, %v1305
    %v1570 = vpack.c.b16 %v1314, %v1306
    %v1571 = vpack.c.b16 %v1315, %v1307
    %v1572 = vpack.c.b16 %v1316, %v1308
    %v1573 = vpack.c.b16 %v1317, %v1309
    %v1574 = vpack.c.b16 %v1318, %v1310
    %v1575 = vpack.c.b16 %v1319, %v1311
    %1832 = vmatprep.subr.bf16.mxu0 %v1321
    %1833 = vmatpush1.bf16.msra.mxu0 %v1320
    %1834 = vmatprep.subr.bf16.mxu0 %v1329
    %1835 = vmatpush1.bf16.msra.mxu0 %v1328
    %1836 = vmatprep.subr.bf16.mxu0 %v1337
    %1837 = vmatpush1.bf16.msra.mxu0 %v1336
    %1838 = vmatprep.subr.bf16.mxu0 %v1345
    %1839 = vmatpush1.bf16.msra.mxu0 %v1344
    %1840 = vmatprep.subr.bf16.mxu0 %v1353
    %1841 = vmatpush1.bf16.msra.mxu0 %v1352
    %1842 = vmatprep.subr.bf16.mxu0 %v1361
    %1843 = vmatpush1.bf16.msra.mxu0 %v1360
    %1844 = vmatprep.subr.bf16.mxu0 %v1369
    %1845 = vmatpush1.bf16.msra.mxu0 %v1368
    %1846 = vmatprep.subr.bf16.mxu0 %v1377
    %1847 = vmatpush1.bf16.msra.mxu0 %v1376
    %1848 = vmatprep.subr.bf16.mxu0 %v1385
    %1849 = vmatpush1.bf16.msra.mxu0 %v1384
    %1850 = vmatprep.subr.bf16.mxu0 %v1393
    %1851 = vmatpush1.bf16.msra.mxu0 %v1392
    %1852 = vmatprep.subr.bf16.mxu0 %v1401
    %1853 = vmatpush1.bf16.msra.mxu0 %v1400
    %1854 = vmatprep.subr.bf16.mxu0 %v1409
    %1855 = vmatpush1.bf16.msra.mxu0 %v1408
    %1856 = vmatprep.subr.bf16.mxu0 %v1417
    %1857 = vmatpush1.bf16.msra.mxu0 %v1416
    %1858 = vmatprep.subr.bf16.mxu0 %v1425
    %1859 = vmatpush1.bf16.msra.mxu0 %v1424
    %1860 = vmatprep.subr.bf16.mxu0 %v1433
    %1861 = vmatpush1.bf16.msra.mxu0 %v1432
    %1862 = vmatprep.subr.bf16.mxu0 %v1441
    %1863 = vmatpush1.bf16.msra.mxu0 %v1440
    %1864 = vmatprep.mubr.bf16.mxu0 %v251
    %1865 = vmatmul.mubr.bf16.gmra.mrb[0].mxu0 %v250
    %v1866 = vpop.f32.mrb[0].mxu0
    %v1867 = vadd.f32 %v515, %v1866
    %v1868 = vpop.f32.mrb[0].mxu0
    %v1869 = vadd.f32 %v519, %v1868
    %v1870 = vpop.f32.mrb[0].mxu0
    %v1871 = vpop.f32.mrb[0].mxu0
    %1872 = vdwg.mxu0
    %1873 = vmatprep.subr.bf16.mxu0 %v1449
    %1874 = vmatpush1.bf16.msra.mxu0 %v1448
    %1875 = vmatprep.subr.bf16.mxu0 %v1457
    %1876 = vmatpush1.bf16.msra.mxu0 %v1456
    %1877 = vmatprep.subr.bf16.mxu0 %v1465
    %1878 = vmatpush1.bf16.msra.mxu0 %v1464
    %1879 = vmatprep.subr.bf16.mxu0 %v1473
    %1880 = vmatpush1.bf16.msra.mxu0 %v1472
    %1881 = vmatprep.subr.bf16.mxu0 %v1481
    %1882 = vmatpush1.bf16.msra.mxu0 %v1480
    %1883 = vmatprep.subr.bf16.mxu0 %v1489
    %1884 = vmatpush1.bf16.msra.mxu0 %v1488
    %1885 = vmatprep.subr.bf16.mxu0 %v1497
    %1886 = vmatpush1.bf16.msra.mxu0 %v1496
    %1887 = vmatprep.subr.bf16.mxu0 %v1505
    %1888 = vmatpush1.bf16.msra.mxu0 %v1504
    %1889 = vmatprep.subr.bf16.mxu0 %v1513
    %1890 = vmatpush1.bf16.msra.mxu0 %v1512
    %1891 = vmatprep.subr.bf16.mxu0 %v1521
    %1892 = vmatpush1.bf16.msra.mxu0 %v1520
    %1893 = vmatprep.subr.bf16.mxu0 %v1529
    %1894 = vmatpush1.bf16.msra.mxu0 %v1528
    %1895 = vmatprep.subr.bf16.mxu0 %v1537
    %1896 = vmatpush1.bf16.msra.mxu0 %v1536
    %1897 = vmatprep.subr.bf16.mxu0 %v1545
    %1898 = vmatpush1.bf16.msra.mxu0 %v1544
    %1899 = vmatprep.subr.bf16.mxu0 %v1553
    %1900 = vmatpush1.bf16.msra.mxu0 %v1552
    %1901 = vmatprep.subr.bf16.mxu0 %v1561
    %1902 = vmatpush1.bf16.msra.mxu0 %v1560
    %1903 = vmatprep.subr.bf16.mxu0 %v1569
    %1904 = vmatpush1.bf16.msra.mxu0 %v1568
    %1905 = vmatprep.mubr.bf16.mxu0 %v253
    %1906 = vmatmul.mubr.bf16.gmra.mrb[0].mxu0 %v252
    %v1907 = vpop.f32.mrb[0].mxu0
    %v1908 = vadd.f32 %v1867, %v1907
    %v1909 = vpop.f32.mrb[0].mxu0
    %v1910 = vadd.f32 %v1869, %v1909
    %v1911 = vpop.f32.mrb[0].mxu0
    %v1912 = vpop.f32.mrb[0].mxu0
    %1913 = vdwg.mxu0
    %1914 = vmatprep.subr.bf16.mxu0 %v1323
    %1915 = vmatpush1.bf16.msra.mxu0 %v1322
    %1916 = vmatprep.subr.bf16.mxu0 %v1331
    %1917 = vmatpush1.bf16.msra.mxu0 %v1330
    %1918 = vmatprep.subr.bf16.mxu0 %v1339
    %1919 = vmatpush1.bf16.msra.mxu0 %v1338
    %1920 = vmatprep.subr.bf16.mxu0 %v1347
    %1921 = vmatpush1.bf16.msra.mxu0 %v1346
    %1922 = vmatprep.subr.bf16.mxu0 %v1355
    %1923 = vmatpush1.bf16.msra.mxu0 %v1354
    %1924 = vmatprep.subr.bf16.mxu0 %v1363
    %1925 = vmatpush1.bf16.msra.mxu0 %v1362
    %1926 = vmatprep.subr.bf16.mxu0 %v1371
    %1927 = vmatpush1.bf16.msra.mxu0 %v1370
    %1928 = vmatprep.subr.bf16.mxu0 %v1379
    %1929 = vmatpush1.bf16.msra.mxu0 %v1378
    %1930 = vmatprep.subr.bf16.mxu0 %v1387
    %1931 = vmatpush1.bf16.msra.mxu0 %v1386
    %1932 = vmatprep.subr.bf16.mxu0 %v1395
    %1933 = vmatpush1.bf16.msra.mxu0 %v1394
    %1934 = vmatprep.subr.bf16.mxu0 %v1403
    %1935 = vmatpush1.bf16.msra.mxu0 %v1402
    %1936 = vmatprep.subr.bf16.mxu0 %v1411
    %1937 = vmatpush1.bf16.msra.mxu0 %v1410
    %1938 = vmatprep.subr.bf16.mxu0 %v1419
    %1939 = vmatpush1.bf16.msra.mxu0 %v1418
    %1940 = vmatprep.subr.bf16.mxu0 %v1427
    %1941 = vmatpush1.bf16.msra.mxu0 %v1426
    %1942 = vmatprep.subr.bf16.mxu0 %v1435
    %1943 = vmatpush1.bf16.msra.mxu0 %v1434
    %1944 = vmatprep.subr.bf16.mxu0 %v1443
    %1945 = vmatpush1.bf16.msra.mxu0 %v1442
    %1946 = vmatprep.mubr.bf16.mxu0 %v251
    %1947 = vmatmul.mubr.bf16.gmra.mrb[0].mxu0 %v250
    %v1948 = vpop.f32.mrb[0].mxu0
    %v1949 = vadd.f32 %v523, %v1948
    %v1950 = vpop.f32.mrb[0].mxu0
    %v1951 = vadd.f32 %v527, %v1950
    %v1952 = vpop.f32.mrb[0].mxu0
    %v1953 = vpop.f32.mrb[0].mxu0
    %1954 = vdwg.mxu0
    %1955 = vmatprep.subr.bf16.mxu0 %v1451
    %1956 = vmatpush1.bf16.msra.mxu0 %v1450
    %1957 = vmatprep.subr.bf16.mxu0 %v1459
    %1958 = vmatpush1.bf16.msra.mxu0 %v1458
    %1959 = vmatprep.subr.bf16.mxu0 %v1467
    %1960 = vmatpush1.bf16.msra.mxu0 %v1466
    %1961 = vmatprep.subr.bf16.mxu0 %v1475
    %1962 = vmatpush1.bf16.msra.mxu0 %v1474
    %1963 = vmatprep.subr.bf16.mxu0 %v1483
    %1964 = vmatpush1.bf16.msra.mxu0 %v1482
    %1965 = vmatprep.subr.bf16.mxu0 %v1491
    %1966 = vmatpush1.bf16.msra.mxu0 %v1490
    %1967 = vmatprep.subr.bf16.mxu0 %v1499
    %1968 = vmatpush1.bf16.msra.mxu0 %v1498
    %1969 = vmatprep.subr.bf16.mxu0 %v1507
    %1970 = vmatpush1.bf16.msra.mxu0 %v1506
    %1971 = vmatprep.subr.bf16.mxu0 %v1515
    %1972 = vmatpush1.bf16.msra.mxu0 %v1514
    %1973 = vmatprep.subr.bf16.mxu0 %v1523
    %1974 = vmatpush1.bf16.msra.mxu0 %v1522
    %1975 = vmatprep.subr.bf16.mxu0 %v1531
    %1976 = vmatpush1.bf16.msra.mxu0 %v1530
    %1977 = vmatprep.subr.bf16.mxu0 %v1539
    %1978 = vmatpush1.bf16.msra.mxu0 %v1538
    %1979 = vmatprep.subr.bf16.mxu0 %v1547
    %1980 = vmatpush1.bf16.msra.mxu0 %v1546
    %1981 = vmatprep.subr.bf16.mxu0 %v1555
    %1982 = vmatpush1.bf16.msra.mxu0 %v1554
    %1983 = vmatprep.subr.bf16.mxu0 %v1563
    %1984 = vmatpush1.bf16.msra.mxu0 %v1562
    %1985 = vmatprep.subr.bf16.mxu0 %v1571
    %1986 = vmatpush1.bf16.msra.mxu0 %v1570
    %1987 = vmatprep.mubr.bf16.mxu0 %v253
    %1988 = vmatmul.mubr.bf16.gmra.mrb[0].mxu0 %v252
    %v1989 = vpop.f32.mrb[0].mxu0
    %v1990 = vadd.f32 %v1949, %v1989
    %v1991 = vpop.f32.mrb[0].mxu0
    %v1992 = vadd.f32 %v1951, %v1991
    %v1993 = vpop.f32.mrb[0].mxu0
    %v1994 = vpop.f32.mrb[0].mxu0
    %1995 = vdwg.mxu0
    %1996 = vmatprep.subr.bf16.mxu0 %v1325
    %1997 = vmatpush1.bf16.msra.mxu0 %v1324
    %1998 = vmatprep.subr.bf16.mxu0 %v1333
    %1999 = vmatpush1.bf16.msra.mxu0 %v1332
    %2000 = vmatprep.subr.bf16.mxu0 %v1341
    %2001 = vmatpush1.bf16.msra.mxu0 %v1340
    %2002 = vmatprep.subr.bf16.mxu0 %v1349
    %2003 = vmatpush1.bf16.msra.mxu0 %v1348
    %2004 = vmatprep.subr.bf16.mxu0 %v1357
    %2005 = vmatpush1.bf16.msra.mxu0 %v1356
    %2006 = vmatprep.subr.bf16.mxu0 %v1365
    %2007 = vmatpush1.bf16.msra.mxu0 %v1364
    %2008 = vmatprep.subr.bf16.mxu0 %v1373
    %2009 = vmatpush1.bf16.msra.mxu0 %v1372
    %2010 = vmatprep.subr.bf16.mxu0 %v1381
    %2011 = vmatpush1.bf16.msra.mxu0 %v1380
    %2012 = vmatprep.subr.bf16.mxu0 %v1389
    %2013 = vmatpush1.bf16.msra.mxu0 %v1388
    %2014 = vmatprep.subr.bf16.mxu0 %v1397
    %2015 = vmatpush1.bf16.msra.mxu0 %v1396
    %2016 = vmatprep.subr.bf16.mxu0 %v1405
    %2017 = vmatpush1.bf16.msra.mxu0 %v1404
    %2018 = vmatprep.subr.bf16.mxu0 %v1413
    %2019 = vmatpush1.bf16.msra.mxu0 %v1412
    %2020 = vmatprep.subr.bf16.mxu0 %v1421
    %2021 = vmatpush1.bf16.msra.mxu0 %v1420
    %2022 = vmatprep.subr.bf16.mxu0 %v1429
    %2023 = vmatpush1.bf16.msra.mxu0 %v1428
    %2024 = vmatprep.subr.bf16.mxu0 %v1437
    %2025 = vmatpush1.bf16.msra.mxu0 %v1436
    %2026 = vmatprep.subr.bf16.mxu0 %v1445
    %2027 = vmatpush1.bf16.msra.mxu0 %v1444
    %2028 = vmatprep.mubr.bf16.mxu0 %v251
    %2029 = vmatmul.mubr.bf16.gmra.mrb[0].mxu0 %v250
    %v2030 = vpop.f32.mrb[0].mxu0
    %v2031 = vadd.f32 %v531, %v2030
    %v2032 = vpop.f32.mrb[0].mxu0
    %v2033 = vadd.f32 %v535, %v2032
    %v2034 = vpop.f32.mrb[0].mxu0
    %v2035 = vpop.f32.mrb[0].mxu0
    %2036 = vdwg.mxu0
    %2037 = vmatprep.subr.bf16.mxu0 %v1453
    %2038 = vmatpush1.bf16.msra.mxu0 %v1452
    %2039 = vmatprep.subr.bf16.mxu0 %v1461
    %2040 = vmatpush1.bf16.msra.mxu0 %v1460
    %2041 = vmatprep.subr.bf16.mxu0 %v1469
    %2042 = vmatpush1.bf16.msra.mxu0 %v1468
    %2043 = vmatprep.subr.bf16.mxu0 %v1477
    %2044 = vmatpush1.bf16.msra.mxu0 %v1476
    %2045 = vmatprep.subr.bf16.mxu0 %v1485
    %2046 = vmatpush1.bf16.msra.mxu0 %v1484
    %2047 = vmatprep.subr.bf16.mxu0 %v1493
    %2048 = vmatpush1.bf16.msra.mxu0 %v1492
    %2049 = vmatprep.subr.bf16.mxu0 %v1501
    %2050 = vmatpush1.bf16.msra.mxu0 %v1500
    %2051 = vmatprep.subr.bf16.mxu0 %v1509
    %2052 = vmatpush1.bf16.msra.mxu0 %v1508
    %2053 = vmatprep.subr.bf16.mxu0 %v1517
    %2054 = vmatpush1.bf16.msra.mxu0 %v1516
    %2055 = vmatprep.subr.bf16.mxu0 %v1525
    %2056 = vmatpush1.bf16.msra.mxu0 %v1524
    %2057 = vmatprep.subr.bf16.mxu0 %v1533
    %2058 = vmatpush1.bf16.msra.mxu0 %v1532
    %2059 = vmatprep.subr.bf16.mxu0 %v1541
    %2060 = vmatpush1.bf16.msra.mxu0 %v1540
    %2061 = vmatprep.subr.bf16.mxu0 %v1549
    %2062 = vmatpush1.bf16.msra.mxu0 %v1548
    %2063 = vmatprep.subr.bf16.mxu0 %v1557
    %2064 = vmatpush1.bf16.msra.mxu0 %v1556
    %2065 = vmatprep.subr.bf16.mxu0 %v1565
    %2066 = vmatpush1.bf16.msra.mxu0 %v1564
    %2067 = vmatprep.subr.bf16.mxu0 %v1573
    %2068 = vmatpush1.bf16.msra.mxu0 %v1572
    %2069 = vmatprep.mubr.bf16.mxu0 %v253
    %2070 = vmatmul.mubr.bf16.gmra.mrb[0].mxu0 %v252
    %v2071 = vpop.f32.mrb[0].mxu0
    %v2072 = vadd.f32 %v2031, %v2071
    %v2073 = vpop.f32.mrb[0].mxu0
    %v2074 = vadd.f32 %v2033, %v2073
    %v2075 = vpop.f32.mrb[0].mxu0
    %v2076 = vpop.f32.mrb[0].mxu0
    %2077 = vdwg.mxu0
    %2078 = vmatprep.subr.bf16.mxu0 %v1327
    %2079 = vmatpush1.bf16.msra.mxu0 %v1326
    %2080 = vmatprep.subr.bf16.mxu0 %v1335
    %2081 = vmatpush1.bf16.msra.mxu0 %v1334
    %2082 = vmatprep.subr.bf16.mxu0 %v1343
    %2083 = vmatpush1.bf16.msra.mxu0 %v1342
    %2084 = vmatprep.subr.bf16.mxu0 %v1351
    %2085 = vmatpush1.bf16.msra.mxu0 %v1350
    %2086 = vmatprep.subr.bf16.mxu0 %v1359
    %2087 = vmatpush1.bf16.msra.mxu0 %v1358
    %2088 = vmatprep.subr.bf16.mxu0 %v1367
    %2089 = vmatpush1.bf16.msra.mxu0 %v1366
    %2090 = vmatprep.subr.bf16.mxu0 %v1375
    %2091 = vmatpush1.bf16.msra.mxu0 %v1374
    %2092 = vmatprep.subr.bf16.mxu0 %v1383
    %2093 = vmatpush1.bf16.msra.mxu0 %v1382
    %2094 = vmatprep.subr.bf16.mxu0 %v1391
    %2095 = vmatpush1.bf16.msra.mxu0 %v1390
    %2096 = vmatprep.subr.bf16.mxu0 %v1399
    %2097 = vmatpush1.bf16.msra.mxu0 %v1398
    %2098 = vmatprep.subr.bf16.mxu0 %v1407
    %2099 = vmatpush1.bf16.msra.mxu0 %v1406
    %2100 = vmatprep.subr.bf16.mxu0 %v1415
    %2101 = vmatpush1.bf16.msra.mxu0 %v1414
    %2102 = vmatprep.subr.bf16.mxu0 %v1423
    %2103 = vmatpush1.bf16.msra.mxu0 %v1422
    %2104 = vmatprep.subr.bf16.mxu0 %v1431
    %2105 = vmatpush1.bf16.msra.mxu0 %v1430
    %2106 = vmatprep.subr.bf16.mxu0 %v1439
    %2107 = vmatpush1.bf16.msra.mxu0 %v1438
    %2108 = vmatprep.subr.bf16.mxu0 %v1447
    %2109 = vmatpush1.bf16.msra.mxu0 %v1446
    %2110 = vmatprep.mubr.bf16.mxu0 %v251
    %2111 = vmatmul.mubr.bf16.gmra.mrb[0].mxu0 %v250
    %v2112 = vpop.f32.mrb[0].mxu0
    %v2113 = vadd.f32 %v539, %v2112
    %v2114 = vpop.f32.mrb[0].mxu0
    %v2115 = vadd.f32 %v543, %v2114
    %v2116 = vpop.f32.mrb[0].mxu0
    %v2117 = vpop.f32.mrb[0].mxu0
    %2118 = vdwg.mxu0
    %2119 = vmatprep.subr.bf16.mxu0 %v1455
    %2120 = vmatpush1.bf16.msra.mxu0 %v1454
    %2121 = vmatprep.subr.bf16.mxu0 %v1463
    %2122 = vmatpush1.bf16.msra.mxu0 %v1462
    %2123 = vmatprep.subr.bf16.mxu0 %v1471
    %2124 = vmatpush1.bf16.msra.mxu0 %v1470
    %2125 = vmatprep.subr.bf16.mxu0 %v1479
    %2126 = vmatpush1.bf16.msra.mxu0 %v1478
    %2127 = vmatprep.subr.bf16.mxu0 %v1487
    %2128 = vmatpush1.bf16.msra.mxu0 %v1486
    %2129 = vmatprep.subr.bf16.mxu0 %v1495
    %2130 = vmatpush1.bf16.msra.mxu0 %v1494
    %2131 = vmatprep.subr.bf16.mxu0 %v1503
    %2132 = vmatpush1.bf16.msra.mxu0 %v1502
    %2133 = vmatprep.subr.bf16.mxu0 %v1511
    %2134 = vmatpush1.bf16.msra.mxu0 %v1510
    %2135 = vmatprep.subr.bf16.mxu0 %v1519
    %2136 = vmatpush1.bf16.msra.mxu0 %v1518
    %2137 = vmatprep.subr.bf16.mxu0 %v1527
    %2138 = vmatpush1.bf16.msra.mxu0 %v1526
    %2139 = vmatprep.subr.bf16.mxu0 %v1535
    %2140 = vmatpush1.bf16.msra.mxu0 %v1534
    %2141 = vmatprep.subr.bf16.mxu0 %v1543
    %2142 = vmatpush1.bf16.msra.mxu0 %v1542
    %2143 = vmatprep.subr.bf16.mxu0 %v1551
    %2144 = vmatpush1.bf16.msra.mxu0 %v1550
    %2145 = vmatprep.subr.bf16.mxu0 %v1559
    %2146 = vmatpush1.bf16.msra.mxu0 %v1558
    %2147 = vmatprep.subr.bf16.mxu0 %v1567
    %2148 = vmatpush1.bf16.msra.mxu0 %v1566
    %2149 = vmatprep.subr.bf16.mxu0 %v1575
    %2150 = vmatpush1.bf16.msra.mxu0 %v1574
    %2151 = vmatprep.mubr.bf16.mxu0 %v253
    %2152 = vmatmul.mubr.bf16.gmra.mrb[0].mxu0 %v252
    %v2153 = vpop.f32.mrb[0].mxu0
    %v2154 = vadd.f32 %v2113, %v2153
    %v2155 = vpop.f32.mrb[0].mxu0
    %v2156 = vadd.f32 %v2115, %v2155
    %v2157 = vpop.f32.mrb[0].mxu0
    %v2158 = vpop.f32.mrb[0].mxu0
    %2159 = vdwg.mxu0
    %vm2160 = vcmp.gt.f32.partialorder %v1908, 0.0
    %vm2161 = vcmp.gt.f32.partialorder %v1910, 0.0
    %vm2162 = vcmp.gt.f32.partialorder %v1990, 0.0
    %vm2163 = vcmp.gt.f32.partialorder %v1992, 0.0
    %vm2164 = vcmp.gt.f32.partialorder %v2072, 0.0
    %vm2165 = vcmp.gt.f32.partialorder %v2074, 0.0
    %vm2166 = vcmp.gt.f32.partialorder %v2154, 0.0
    %vm2167 = vcmp.gt.f32.partialorder %v2156, 0.0
    %v2168 = vmul.f32 %v1908, 0.01
    %v2169 = vmul.f32 %v1910, 0.01
    %v2170 = vmul.f32 %v1990, 0.01
    %v2171 = vmul.f32 %v1992, 0.01
    %v2172 = vmul.f32 %v2072, 0.01
    %v2173 = vmul.f32 %v2074, 0.01
    %v2174 = vmul.f32 %v2154, 0.01
    %v2175 = vmul.f32 %v2156, 0.01
    %v2176 = vsel %vm2160, %v1908, %v2168
    %v2177 = vsel %vm2161, %v1910, %v2169
    %v2178 = vsel %vm2162, %v1990, %v2170
    %v2179 = vsel %vm2163, %v1992, %v2171
    %v2180 = vsel %vm2164, %v2072, %v2172
    %v2181 = vsel %vm2165, %v2074, %v2173
    %v2182 = vsel %vm2166, %v2154, %v2174
    %v2183 = vsel %vm2167, %v2156, %v2175
    %v2184 = vld [vmem:[%s5] sm:$0xff]
    %v2186 = vlaneseq
    %v2187 = vshrl.u32 %v2186, 7
    %v2188 = vsub.s32 0, %v2187
    %v2189 = vrot.slane %v2184, %v2188
    %v2190 = vlaneseq
    %v2191 = vshrl.u32 %v2190, 7
    %v2192 = vsub.s32 1, %v2191
    %v2193 = vrot.slane %v2184, %v2192
    %v2194 = vlaneseq
    %v2195 = vshrl.u32 %v2194, 7
    %v2196 = vsub.s32 2, %v2195
    %v2197 = vrot.slane %v2184, %v2196
    %v2198 = vlaneseq
    %v2199 = vshrl.u32 %v2198, 7
    %v2200 = vsub.s32 3, %v2199
    %v2201 = vrot.slane %v2184, %v2200
    %v2202 = vlaneseq
    %v2203 = vshrl.u32 %v2202, 7
    %v2204 = vsub.s32 4, %v2203
    %v2205 = vrot.slane %v2184, %v2204
    %v2206 = vlaneseq
    %v2207 = vshrl.u32 %v2206, 7
    %v2208 = vsub.s32 5, %v2207
    %v2209 = vrot.slane %v2184, %v2208
    %v2210 = vlaneseq
    %v2211 = vshrl.u32 %v2210, 7
    %v2212 = vsub.s32 6, %v2211
    %v2213 = vrot.slane %v2184, %v2212
    %v2214 = vlaneseq
    %v2215 = vshrl.u32 %v2214, 7
    %v2216 = vsub.s32 7, %v2215
    %v2217 = vrot.slane %v2184, %v2216
    %v2226 = vmul.f32 %v2176, %v2189
    %v2227 = vmul.f32 %v2177, %v2193
    %v2228 = vmul.f32 %v2178, %v2197
    %v2229 = vmul.f32 %v2179, %v2201
    %v2230 = vmul.f32 %v2180, %v2205
    %v2231 = vmul.f32 %v2181, %v2209
    %v2232 = vmul.f32 %v2182, %v2213
    %v2233 = vmul.f32 %v2183, %v2217
    %v2234 = vadd.f32 %v2226, %v2227
    %v2235 = vadd.f32 %v2234, %v2228
    %v2236 = vadd.f32 %v2235, %v2229
    %v2237 = vadd.f32 %v2236, %v2230
    %v2238 = vadd.f32 %v2237, %v2231
    %v2239 = vadd.f32 %v2238, %v2232
    %v2240 = vadd.f32 %v2239, %v2233
    %2241 = vadd.xlane.f32.xlu0 %v2240
    %v2242 = vpop.xlane.xlu0 %2241
    %v2243 = vld [vmem:[#allocation2] sm:$0x1]
    %v2245 = vlaneseq
    %v2246 = vshrl.u32 %v2245, 7
    %v2247 = vsub.s32 0, %v2246
    %v2248 = vrot.slane %v2243, %v2247
    %v2250 = vadd.f32 %v2242, %v2248
    %vm2251 = vcmask 7168
    %2252 = vst.msk [vmem:[%s7] sm:$0xff] %vm2251, %v2250
    // Predicated region
    $region46: #{tpu_custom_call.1} parent=1 // pred_check
      _
    $region47: #{tpu_custom_call.1} parent=1 // pred_check_branch
      %2254 = sbr.rel (0) target = $region49
    $region48: #{tpu_custom_call.1} parent=1 // pred_region
      _
    $region49: #{tpu_custom_call.1} parent=1 // pred_fallthru
      _
    // Predicated region
    $region50: #{tpu_custom_call.1} parent=1 // pred_check
      _
    $region51: #{tpu_custom_call.1} parent=1 // pred_check_branch
      %2256 = sbr.rel (0) target = $region53
    $region52: #{tpu_custom_call.1} parent=1 // pred_region
      _
    $region53: #{tpu_custom_call.1} parent=1 // pred_fallthru
      _
    %2257 = vsyncpa [#allocation4], 1
    %2258 = vsyncpa [#allocation6], 1
    %2259 = vsyncpa [#allocation9], 1

</llo_original>
